<compile_context>
chip_gen: v5e
topology: v5e:2x2
jax: 0.10.0
libtpu: 0.0.40
codegen_flags: <defaults>
</compile_context>

<pallas_src>
import jax
import jax.numpy as jnp
from jax import lax
from jax.experimental import pallas as pl
from jax.experimental.pallas import tpu as pltpu

NUM_DOMAINS = 19      # len(DOMIAN_PROMPTS) in the reference module
EMBED_DIM = 512       # CLIP text-embedding dim / nn.Linear(inshape, 512) output dim
LANE = 128


def _round_up(x, m):
    return ((x + m - 1) // m) * m


# ---------------------------------------------------------------------------
# Pallas kernels
# ---------------------------------------------------------------------------
def _eval_kernel_proj(feat_ref, w_ref, b_ref, text_ref, out_ref):
    """feat[tn, F] -> Linear(F,512) -> l2-normalize -> @ text[512, DCP].

    w is pre-transposed to [F, 512] (canonical MXU feed).  text already has the
    100x scale and per-domain zero columns baked in and is lane-padded to a
    multiple of 128, so the store is unmasked.  The 1/||.|| scale is linear and
    is applied after the (small) second matmul.
    """
    feat = feat_ref[...].astype(w_ref.dtype)                      # no-op if feat is bf16
    proj = jnp.dot(feat, w_ref[...],
                   preferred_element_type=jnp.float32) + b_ref[...]   # [tn, 512] f32
    inv = lax.rsqrt(jnp.sum(proj * proj, axis=-1, keepdims=True))     # EUP rsqrt
    s = jnp.dot(proj, text_ref[...],
                preferred_element_type=jnp.float32)                   # f32 (tiny matmul)
    out_ref[...] = s * inv


def _eval_kernel_noproj(feat_ref, text_ref, out_ref):
    """Same as above but no projection (feat is already 512-wide)."""
    feat = feat_ref[...].astype(jnp.float32)
    inv = lax.rsqrt(jnp.sum(feat * feat, axis=-1, keepdims=True))
    s = jnp.dot(feat, text_ref[...], preferred_element_type=jnp.float32)
    out_ref[...] = s * inv


# ---------------------------------------------------------------------------
# Constant prep (once per model in production; cheap per call here)
# ---------------------------------------------------------------------------
def _prepare_text_matrix(text_features, num_class):
    """[D*C, 512] -> f32 [512, pad128(D*(C+1))] with the 100x scale folded in and a
    zero 'background' column per domain baked in."""
    dc, dim = text_features.shape
    num_domains = dc // num_class
    dc1 = num_domains * (num_class + 1)
    dc1_pad = _round_up(dc1, LANE)
    t = (100.0 * text_features.astype(jnp.float32)).reshape(num_domains, num_class, dim)
    t = jnp.pad(t, ((0, 0), (0, 1), (0, 0)))          # zero column per domain
    t = jnp.transpose(t.reshape(dc1, dim))            # [512, D*(C+1)]
    t = jnp.pad(t, ((0, 0), (0, dc1_pad - dc1)))      # lane-pad to multiple of 128
    return t, dc1


# ---------------------------------------------------------------------------
# Wrapper (eval-mode forward)
# ---------------------------------------------------------------------------
def clip_predictor_style_eval(feat, proj_w, proj_b, text_features, num_class,
                              *, row_tile=512, compute_dtype=jnp.bfloat16,
                              return_padded=False):
    """Eval-mode forward of ClipPredictorStyle.

    feat:          [N, inshape]  float32 or bfloat16 (bf16 halves the dominant HBM read)
    proj_w:        [512, inshape] (torch nn.Linear weight layout)
    proj_b:        [512]
    text_features: [D * num_class, 512], rows pre-L2-normalized
    returns:       [N, D * (num_class + 1)] float32, or (padded_scores, valid_cols)
                   when return_padded=True (padded to a multiple of 128 lanes,
                   extra columns are zero) so a fused consumer can skip the slice.
    """
    N, F = feat.shape
    text_comb, dc1 = _prepare_text_matrix(text_features, num_class)
    dcp = text_comb.shape[1]

    feat_isize = jnp.dtype(feat.dtype).itemsize
    w_isize = jnp.dtype(compute_dtype).itemsize

    # Row tile: as large as practical for MXU/HBM efficiency, but capped at
    # ceil(N/2) so the (parallel) grid has >= 2 steps and both v7x TensorCores
    # get work.  Always a multiple of 8 (sublane constraint).
    tn = max(8, min(row_tile, _round_up(max(pl.cdiv(N, 2), 8), 8)))

    def vmem_need(t):
        n = 2 * t * F * feat_isize                    # feat tile, double-buffered
        n += 2 * t * dcp * 4                          # f32 output tile, double-buffered
        n += 2 * EMBED_DIM * dcp * 4                  # resident f32 text matrix
        if F > EMBED_DIM:
            n += 2 * F * EMBED_DIM * w_isize          # resident projection weight
            n += 2 * EMBED_DIM * 4                    # resident bias
        return n

    # Shrink the tile instead of blindly growing the VMEM reservation.
    VMEM_BUDGET = 40 * 1024 * 1024   # safe headroom on v5e/v6e (128 MiB) and v7x (64 MiB)
    while tn > 8 and vmem_need(tn) > VMEM_BUDGET:
        tn = max(8, _round_up(tn // 2, 8))
    # TODO(synk): for very large inshape (F >~ 8K at tn >= 512) add a K grid axis with
    # an f32 VMEM accumulator instead of shrinking the row tile further.

    grid = (pl.cdiv(N, tn),)
    cparams = pltpu.CompilerParams(
        dimension_semantics=("parallel",),
        vmem_limit_bytes=int(min(max(vmem_need(tn) * 3 // 2, 16 * 1024 * 1024),
                                 48 * 1024 * 1024)),
    )

    if F > EMBED_DIM:
        # Pre-transpose the constant weight ONCE -> canonical [tn,F] x [F,512] matmul.
        w = jnp.transpose(proj_w).astype(compute_dtype)           # [F, 512]
        b = proj_b.astype(jnp.float32).reshape(1, EMBED_DIM)
        scores = pl.pallas_call(
            _eval_kernel_proj,
            out_shape=jax.ShapeDtypeStruct((N, dcp), jnp.float32),
            grid=grid,
            in_specs=[
                pl.BlockSpec((tn, F), lambda i: (i, 0)),
                pl.BlockSpec((F, EMBED_DIM), lambda i: (0, 0)),       # resident weight
                pl.BlockSpec((1, EMBED_DIM), lambda i: (0, 0)),       # resident bias
                pl.BlockSpec((EMBED_DIM, dcp), lambda i: (0, 0)),     # resident text matrix
            ],
            out_specs=pl.BlockSpec((tn, dcp), lambda i: (i, 0)),
            compiler_params=cparams,
        )(feat, w, b, text_comb)
    else:
        assert F == EMBED_DIM, (
            "no-projection branch requires feat dim == 512 "
            "(matches the PyTorch matmul against 512-dim text features)")
        scores = pl.pallas_call(
            _eval_kernel_noproj,
            out_shape=jax.ShapeDtypeStruct((N, dcp), jnp.float32),
            grid=grid,
            in_specs=[
                pl.BlockSpec((tn, EMBED_DIM), lambda i: (i, 0)),
                pl.BlockSpec((EMBED_DIM, dcp), lambda i: (0, 0)),
            ],
            out_specs=pl.BlockSpec((tn, dcp), lambda i: (i, 0)),
            compiler_params=cparams,
        )(feat, text_comb)

    if return_padded:
        # Lane-dense padded slab [N, pad128(D*(C+1))]; columns dc1.. are zero.
        # Avoids an extra HBM slice pass when the consumer can index it directly.
        return scores, dc1
    return scores[:, :dc1]


# Pure-JAX reference for a correctness check.
def _reference_eval(feat, proj_w, proj_b, text_features, num_class):
    if feat.shape[-1] > EMBED_DIM:
        feat = feat @ proj_w.T + proj_b
    feat = feat / jnp.linalg.norm(feat, axis=-1, keepdims=True)
    N = feat.shape[0]
    num_domains = text_features.shape[0] // num_class
    outs = []
    for j in range(num_domains):
        s = 100.0 * feat @ text_features[j * num_class:(j + 1) * num_class].T
        s = jnp.concatenate([s, jnp.zeros((N, 1), dtype=s.dtype)], axis=1)
        outs.append(s)
    return jnp.concatenate(outs, axis=-1)


if __name__ == "__main__":
    key = jax.random.PRNGKey(0)
    k_feat, k_w, k_b, k_text, k_feat2, k_feat3 = jax.random.split(key, 6)

    num_class = 3         # len(clsnames)
    inshape = 1024        # > 512, exercises the projection branch

    proj_w = jax.random.normal(k_w, (EMBED_DIM, inshape), dtype=jnp.float32) * 0.02
    proj_b = jax.random.normal(k_b, (EMBED_DIM,), dtype=jnp.float32) * 0.02

    # Synthetic CLIP text features: [D * C, 512], rows L2-normalized.
    text_features = jax.random.normal(
        k_text, (NUM_DOMAINS * num_class, EMBED_DIM), dtype=jnp.float32)
    text_features = text_features / jnp.linalg.norm(
        text_features, axis=-1, keepdims=True)

    # 1) projection branch, f32 compute path (tight check)
    feat = jax.random.normal(k_feat, (8, inshape), dtype=jnp.float32)
    out = jax.block_until_ready(clip_predictor_style_eval(
        feat, proj_w, proj_b, text_features, num_class,
        compute_dtype=jnp.float32))
    ref = _reference_eval(feat, proj_w, proj_b, text_features, num_class)
    assert out.shape == (8, NUM_DOMAINS * (num_class + 1)), out.shape
    assert jnp.allclose(out, ref, atol=3e-3, rtol=3e-3), (
        float(jnp.max(jnp.abs(out - ref))))

    # 2) projection branch, bf16 projection matmul (default), multi-step grid,
    #    ragged tail, >= 2 grid steps for megacore.
    feat2 = jax.random.normal(k_feat2, (200, inshape), dtype=jnp.float32)
    out2 = jax.block_until_ready(clip_predictor_style_eval(
        feat2, proj_w, proj_b, text_features, num_class))
    ref2 = _reference_eval(feat2, proj_w, proj_b, text_features, num_class)
    assert out2.shape == (200, NUM_DOMAINS * (num_class + 1)), out2.shape
    assert jnp.allclose(out2, ref2, atol=0.5, rtol=0.05), (
        float(jnp.max(jnp.abs(out2 - ref2))))

    # 3) no-projection branch (feat already 512-wide), f32
    feat3 = jax.random.normal(k_feat3, (16, EMBED_DIM), dtype=jnp.float32)
    out3 = jax.block_until_ready(clip_predictor_style_eval(
        feat3, proj_w, proj_b, text_features, num_class,
        compute_dtype=jnp.float32))
    ref3 = _reference_eval(feat3, proj_w, proj_b, text_features, num_class)
    assert out3.shape == (16, NUM_DOMAINS * (num_class + 1)), out3.shape
    assert jnp.allclose(out3, ref3, atol=3e-3, rtol=3e-3), (
        float(jnp.max(jnp.abs(out3 - ref3))))

    # 4) bf16 feat input (halves the dominant HBM read) + padded-slab output path.
    feat4 = feat2.astype(jnp.bfloat16)
    out4_pad, valid = clip_predictor_style_eval(
        feat4, proj_w, proj_b, text_features, num_class, return_padded=True)
    out4_pad = jax.block_until_ready(out4_pad)
    ref4 = _reference_eval(feat4.astype(jnp.float32), proj_w, proj_b,
                           text_features, num_class)
    assert valid == NUM_DOMAINS * (num_class + 1)
    assert out4_pad.shape[1] % 128 == 0
    assert jnp.allclose(out4_pad[:, :valid], ref4, atol=0.5, rtol=0.05), (
        float(jnp.max(jnp.abs(out4_pad[:, :valid] - ref4))))
    assert jnp.all(out4_pad[:, valid:] == 0.0)

    print("KERNEL_OK")
</pallas_src>

<mosaic_0001>
module attributes {stable_mosaic.version = 11 : i64} {
  func.func @_eval_kernel_proj(%arg0: i32, %arg1: memref<8x1024xf32, #tpu.memory_space<vmem>>, %arg2: memref<1024x512xf32, #tpu.memory_space<vmem>>, %arg3: memref<1x512xf32, #tpu.memory_space<vmem>>, %arg4: memref<512x128xf32, #tpu.memory_space<vmem>>, %arg5: memref<8x128xf32, #tpu.memory_space<vmem>>) attributes {dimension_semantics = [#tpu.dimension_semantics<parallel>], iteration_bounds = array<i64: 1>, scalar_prefetch = 0 : i64, scratch_operands = 0 : i64, tpu.core_type = #tpu.core_type<tc>, window_params = [{transform_indices = @transform_0, window_bounds = array<i64: 8, 1024>}, {pipeline_mode = #tpu.pipeline_mode<synchronous>, transform_indices = @transform_1, window_bounds = array<i64: 1024, 512>}, {pipeline_mode = #tpu.pipeline_mode<synchronous>, transform_indices = @transform_2, window_bounds = array<i64: 1, 512>}, {pipeline_mode = #tpu.pipeline_mode<synchronous>, transform_indices = @transform_3, window_bounds = array<i64: 512, 128>}, {transform_indices = @transform_4, window_bounds = array<i64: 8, 128>}]} {
    %c0 = arith.constant 0 : index
    %c0_0 = arith.constant 0 : index
    %0 = vector.load %arg1[%c0, %c0_0] : memref<8x1024xf32, #tpu.memory_space<vmem>>, vector<8x1024xf32>
    %c0_1 = arith.constant 0 : index
    %c0_2 = arith.constant 0 : index
    %1 = vector.load %arg2[%c0_1, %c0_2] : memref<1024x512xf32, #tpu.memory_space<vmem>>, vector<1024x512xf32>
    %cst = arith.constant dense<0.000000e+00> : vector<8x512xf32>
    %2 = tpu.matmul %0, %1, %cst {dimension_numbers = #tpu.dot_dimension_numbers<[1], [0], [0], [1], [0, 0, 1, 1], [], []>} : vector<8x1024xf32>, vector<1024x512xf32>, vector<8x512xf32> -> vector<8x512xf32>
    %c0_3 = arith.constant 0 : index
    %c0_4 = arith.constant 0 : index
    %3 = vector.load %arg3[%c0_3, %c0_4] : memref<1x512xf32, #tpu.memory_space<vmem>>, vector<1x512xf32>
    %4 = vector.broadcast %3 : vector<1x512xf32> to vector<8x512xf32>
    %5 = arith.addf %2, %4 : vector<8x512xf32>
    %6 = arith.mulf %5, %5 : vector<8x512xf32>
    %cst_5 = arith.constant dense<0.000000e+00> : vector<8xf32>
    %7 = vector.multi_reduction <add>, %6, %cst_5 [1] : vector<8x512xf32> to vector<8xf32>
    %8 = vector.shape_cast %7 : vector<8xf32> to vector<8x1xf32>
    %9 = math.rsqrt %8 : vector<8x1xf32>
    %c0_6 = arith.constant 0 : index
    %c0_7 = arith.constant 0 : index
    %10 = vector.load %arg4[%c0_6, %c0_7] : memref<512x128xf32, #tpu.memory_space<vmem>>, vector<512x128xf32>
    %cst_8 = arith.constant dense<0.000000e+00> : vector<8x128xf32>
    %11 = tpu.matmul %5, %10, %cst_8 {dimension_numbers = #tpu.dot_dimension_numbers<[1], [0], [0], [1], [0, 0, 1, 1], [], []>} : vector<8x512xf32>, vector<512x128xf32>, vector<8x128xf32> -> vector<8x128xf32>
    %12 = vector.broadcast %9 : vector<8x1xf32> to vector<8x128xf32>
    %13 = arith.mulf %11, %12 : vector<8x128xf32>
    %c0_9 = arith.constant 0 : index
    %c0_10 = arith.constant 0 : index
    %14 = vector.load %arg5[%c0_9, %c0_10] : memref<8x128xf32, #tpu.memory_space<vmem>>, vector<8x128xf32>
    tpu.vector_store %arg5[%c0_9, %c0_10], %13 {strides = array<i32>} : memref<8x128xf32, #tpu.memory_space<vmem>>, vector<8x128xf32>,
    return
  }
  func.func @transform_0(%arg0: i32) -> (i32, i32) {
    %c0_i32 = arith.constant 0 : i32
    %c0_i32_0 = arith.constant 0 : i32
    return %arg0, %c0_i32 : i32, i32
  }
  func.func @transform_1(%arg0: i32) -> (i32, i32) {
    %c0_i32 = arith.constant 0 : i32
    %c0_i32_0 = arith.constant 0 : i32
    %c0_i32_1 = arith.constant 0 : i32
    return %c0_i32, %c0_i32_0 : i32, i32
  }
  func.func @transform_2(%arg0: i32) -> (i32, i32) {
    %c0_i32 = arith.constant 0 : i32
    %c0_i32_0 = arith.constant 0 : i32
    %c0_i32_1 = arith.constant 0 : i32
    return %c0_i32, %c0_i32_0 : i32, i32
  }
  func.func @transform_3(%arg0: i32) -> (i32, i32) {
    %c0_i32 = arith.constant 0 : i32
    %c0_i32_0 = arith.constant 0 : i32
    %c0_i32_1 = arith.constant 0 : i32
    return %c0_i32, %c0_i32_0 : i32, i32
  }
  func.func @transform_4(%arg0: i32) -> (i32, i32) {
    %c0_i32 = arith.constant 0 : i32
    %c0_i32_0 = arith.constant 0 : i32
    return %arg0, %c0_i32 : i32, i32
  }
}

</mosaic_0001>

<llo_original>
// kernel: tpu_custom_call.1
$region0: #{tpu_custom_call.1}
  #allocation0 [shape = 'u32[]', space=smem, size = 0x4, offset = 0x4, fixed_abs, tag = 'smem constant byte address 0x4 - core index']
  #allocation1 [shape = 'u32[72,128]{1,0:T(1,128)}', space=vmem, size = 0x9000, scoped, tag = 'internal scratch']
  %s0 = inlined_call_operand.hbm [shape: f32[8,1024], index: 0, kind: input, shape index: {}]
  %s1 = inlined_call_operand.hbm [shape: f32[1024,512], index: 1, kind: input, shape index: {}]
  %s2 = inlined_call_operand.hbm [shape: f32[1,512], index: 2, kind: input, shape index: {}]
  %s3 = inlined_call_operand.hbm [shape: f32[512,128], index: 3, kind: input, shape index: {}]
  %s4 = inlined_call_operand.hbm [shape: f32[8,128], index: 4, kind: output, shape index: {}]
  %s5 = sld [smem:[#allocation0]]
  $region42: #{tpu_custom_call.1} parent=0
    _
  %s7 = ssub.s32 1, %s5
  %s8 = scalar_select 0, %s7, %s5
  $region1: #{tpu_custom_call.1} parent=0
    #allocation2 [shape = 'u8[32768]{0}', space=vmem, size = 0x8000, scoped, tag = 'input window, operand 0, single buffered']
    #allocation3 [shape = 's32[1]{0}', space=sflag, size = 0x4, scoped, tag = 'scoped memory for tpu_custom_call.1']
    #allocation4 [shape = 's32[1]{0}', space=sflag, size = 0x4, scoped, tag = 'scoped memory for tpu_custom_call.1']
    #allocation5 [shape = 'u8[2097152]{0}', space=vmem, size = 0x200000, scoped, tag = 'input window, operand 1, single buffered']
    #allocation6 [shape = 's32[1]{0}', space=sflag, size = 0x4, scoped, tag = 'scoped memory for tpu_custom_call.1']
    #allocation7 [shape = 'u8[2048]{0}', space=vmem, size = 0x800, scoped, tag = 'input window, operand 2, single buffered']
    #allocation8 [shape = 'u8[262144]{0}', space=vmem, size = 0x40000, scoped, tag = 'input window, operand 3, single buffered']
    #allocation9 [shape = 's32[1]{0}', space=sflag, size = 0x4, scoped, tag = 'scoped memory for tpu_custom_call.1']
    #allocation10 [shape = 'u8[4096]{0}', space=vmem, size = 0x1000, scoped, tag = 'output window, operand 0, single buffered']
    %9 = vsyncpa [#allocation3], 0
    %10 = vsyncpa [#allocation6], 0
    %11 = vsyncpa [#allocation9], 0
    %12 = vsyncpa [#allocation4], 0
    // Predicated region
    $region2: #{tpu_custom_call.1} parent=1 // pred_check
      _
    $region3: #{tpu_custom_call.1} parent=1 // pred_check_branch
      %14 = sbr.rel (0) target = $region5
    $region4: #{tpu_custom_call.1} parent=1 // pred_region
      %16 = vsyncadd [#allocation3], 0
      %s18 = sshll.u32 %s0, 4
      %s19 = int_to_ptr.hbm [resolvable:$true] %s18
      %s20 = sshll.u32 [#allocation2], 4
      %s21 = int_to_ptr.vmem [resolvable:$true] %s20
      %23 = dma.hbm_to_vmem [thread:$0]  %s19, 1024, %s21, [#allocation3]
    $region5: #{tpu_custom_call.1} parent=1 // pred_fallthru
      _
    // Predicated region
    $region6: #{tpu_custom_call.1} parent=1 // pred_check
      _
    $region7: #{tpu_custom_call.1} parent=1 // pred_check_branch
      %25 = sbr.rel (0) target = $region9
    $region8: #{tpu_custom_call.1} parent=1 // pred_region
      %27 = vsyncadd [#allocation6], 0
      %s28 = sshll.u32 %s1, 4
      %s29 = int_to_ptr.hbm [resolvable:$true] %s28
      %s30 = sshll.u32 [#allocation5], 4
      %s31 = int_to_ptr.vmem [resolvable:$true] %s30
      %36 = dma.hbm_to_vmem [thread:$0]  %s29, 65536, %s31, [#allocation6], 512, 512, 32
    $region9: #{tpu_custom_call.1} parent=1 // pred_fallthru
      _
    // Predicated region
    $region10: #{tpu_custom_call.1} parent=1 // pred_check
      _
    $region11: #{tpu_custom_call.1} parent=1 // pred_check_branch
      %38 = sbr.rel (0) target = $region13
    $region12: #{tpu_custom_call.1} parent=1 // pred_region
      %40 = vsyncadd [#allocation6], 0
      %s42 = sshll.u32 %s2, 4
      %s43 = int_to_ptr.hbm [resolvable:$true] %s42
      %s44 = sshll.u32 [#allocation7], 4
      %s45 = int_to_ptr.vmem [resolvable:$true] %s44
      %47 = dma.hbm_to_vmem [thread:$0]  %s43, 64, %s45, [#allocation6]
    $region13: #{tpu_custom_call.1} parent=1 // pred_fallthru
      _
    // Predicated region
    $region14: #{tpu_custom_call.1} parent=1 // pred_check
      _
    $region15: #{tpu_custom_call.1} parent=1 // pred_check_branch
      %49 = sbr.rel (0) target = $region17
    $region16: #{tpu_custom_call.1} parent=1 // pred_region
      %51 = vsyncadd [#allocation9], 0
      %s52 = sshll.u32 %s3, 4
      %s53 = int_to_ptr.hbm [resolvable:$true] %s52
      %s54 = sshll.u32 [#allocation8], 4
      %s55 = int_to_ptr.vmem [resolvable:$true] %s54
      %60 = dma.hbm_to_vmem [thread:$0]  %s53, 8192, %s55, [#allocation9], 128, 128, 8
    $region17: #{tpu_custom_call.1} parent=1 // pred_fallthru
      _
    // Predicated region
    $region18: #{tpu_custom_call.1} parent=1 // pred_check
      _
    $region19: #{tpu_custom_call.1} parent=1 // pred_check_branch
      %62 = sbr.rel (0) target = $region21
    $region20: #{tpu_custom_call.1} parent=1 // pred_region
      %64 = dma.done [#allocation3], 1024
    $region21: #{tpu_custom_call.1} parent=1 // pred_fallthru
      _
    // Predicated region
    $region22: #{tpu_custom_call.1} parent=1 // pred_check
      _
    $region23: #{tpu_custom_call.1} parent=1 // pred_check_branch
      %66 = sbr.rel (0) target = $region25
    $region24: #{tpu_custom_call.1} parent=1 // pred_region
      %68 = dma.done [#allocation6], 65536
    $region25: #{tpu_custom_call.1} parent=1 // pred_fallthru
      _
    // Predicated region
    $region26: #{tpu_custom_call.1} parent=1 // pred_check
      _
    $region27: #{tpu_custom_call.1} parent=1 // pred_check_branch
      %70 = sbr.rel (0) target = $region29
    $region28: #{tpu_custom_call.1} parent=1 // pred_region
      %72 = dma.done [#allocation6], 64
    $region29: #{tpu_custom_call.1} parent=1 // pred_fallthru
      _
    // Predicated region
    $region30: #{tpu_custom_call.1} parent=1 // pred_check
      _
    $region31: #{tpu_custom_call.1} parent=1 // pred_check_branch
      %74 = sbr.rel (0) target = $region33
    $region32: #{tpu_custom_call.1} parent=1 // pred_region
      %76 = dma.done [#allocation9], 8192
    $region33: #{tpu_custom_call.1} parent=1 // pred_fallthru
      _
    %v77 = vld [vmem:[#allocation2] sm:$0xff]
    %v78 = vld [vmem:[#allocation2 + $0x8] sm:$0xff]
    %v79 = vld [vmem:[#allocation2 + $0x10] sm:$0xff]
    %v80 = vld [vmem:[#allocation2 + $0x18] sm:$0xff]
    %v81 = vld [vmem:[#allocation2 + $0x20] sm:$0xff]
    %v82 = vld [vmem:[#allocation2 + $0x28] sm:$0xff]
    %v83 = vld [vmem:[#allocation2 + $0x30] sm:$0xff]
    %v84 = vld [vmem:[#allocation2 + $0x38] sm:$0xff]
    %v85 = vld [vmem:[#allocation5] sm:$0xff]
    %v86 = vld [vmem:[#allocation5 + $0x8] sm:$0xff]
    %v87 = vld [vmem:[#allocation5 + $0x10] sm:$0xff]
    %v88 = vld [vmem:[#allocation5 + $0x18] sm:$0xff]
    %v89 = vld [vmem:[#allocation5 + $0x20] sm:$0xff]
    %v90 = vld [vmem:[#allocation5 + $0x28] sm:$0xff]
    %v91 = vld [vmem:[#allocation5 + $0x30] sm:$0xff]
    %v92 = vld [vmem:[#allocation5 + $0x38] sm:$0xff]
    %v93 = vld [vmem:[#allocation5 + $0x40] sm:$0xff]
    %v94 = vld [vmem:[#allocation5 + $0x48] sm:$0xff]
    %v95 = vld [vmem:[#allocation5 + $0x50] sm:$0xff]
    %v96 = vld [vmem:[#allocation5 + $0x58] sm:$0xff]
    %v97 = vld [vmem:[#allocation5 + $0x60] sm:$0xff]
    %v98 = vld [vmem:[#allocation5 + $0x68] sm:$0xff]
    %v99 = vld [vmem:[#allocation5 + $0x70] sm:$0xff]
    %v100 = vld [vmem:[#allocation5 + $0x78] sm:$0xff]
    %v101 = vld [vmem:[#allocation5 + $0x80] sm:$0xff]
    %v102 = vld [vmem:[#allocation5 + $0x88] sm:$0xff]
    %v103 = vld [vmem:[#allocation5 + $0x90] sm:$0xff]
    %v104 = vld [vmem:[#allocation5 + $0x98] sm:$0xff]
    %v105 = vld [vmem:[#allocation5 + $0xa0] sm:$0xff]
    %v106 = vld [vmem:[#allocation5 + $0xa8] sm:$0xff]
    %v107 = vld [vmem:[#allocation5 + $0xb0] sm:$0xff]
    %v108 = vld [vmem:[#allocation5 + $0xb8] sm:$0xff]
    %v109 = vld [vmem:[#allocation5 + $0xc0] sm:$0xff]
    %v110 = vld [vmem:[#allocation5 + $0xc8] sm:$0xff]
    %v111 = vld [vmem:[#allocation5 + $0xd0] sm:$0xff]
    %v112 = vld [vmem:[#allocation5 + $0xd8] sm:$0xff]
    %v113 = vld [vmem:[#allocation5 + $0xe0] sm:$0xff]
    %v114 = vld [vmem:[#allocation5 + $0xe8] sm:$0xff]
    %v115 = vld [vmem:[#allocation5 + $0xf0] sm:$0xff]
    %v116 = vld [vmem:[#allocation5 + $0xf8] sm:$0xff]
    %v117 = vld [vmem:[#allocation5 + $0x100] sm:$0xff]
    %v118 = vld [vmem:[#allocation5 + $0x108] sm:$0xff]
    %v119 = vld [vmem:[#allocation5 + $0x110] sm:$0xff]
    %v120 = vld [vmem:[#allocation5 + $0x118] sm:$0xff]
    %v121 = vld [vmem:[#allocation5 + $0x120] sm:$0xff]
    %v122 = vld [vmem:[#allocation5 + $0x128] sm:$0xff]
    %v123 = vld [vmem:[#allocation5 + $0x130] sm:$0xff]
    %v124 = vld [vmem:[#allocation5 + $0x138] sm:$0xff]
    %v125 = vld [vmem:[#allocation5 + $0x140] sm:$0xff]
    %v126 = vld [vmem:[#allocation5 + $0x148] sm:$0xff]
    %v127 = vld [vmem:[#allocation5 + $0x150] sm:$0xff]
    %v128 = vld [vmem:[#allocation5 + $0x158] sm:$0xff]
    %v129 = vld [vmem:[#allocation5 + $0x160] sm:$0xff]
    %v130 = vld [vmem:[#allocation5 + $0x168] sm:$0xff]
    %v131 = vld [vmem:[#allocation5 + $0x170] sm:$0xff]
    %v132 = vld [vmem:[#allocation5 + $0x178] sm:$0xff]
    %v133 = vld [vmem:[#allocation5 + $0x180] sm:$0xff]
    %v134 = vld [vmem:[#allocation5 + $0x188] sm:$0xff]
    %v135 = vld [vmem:[#allocation5 + $0x190] sm:$0xff]
    %v136 = vld [vmem:[#allocation5 + $0x198] sm:$0xff]
    %v137 = vld [vmem:[#allocation5 + $0x1a0] sm:$0xff]
    %v138 = vld [vmem:[#allocation5 + $0x1a8] sm:$0xff]
    %v139 = vld [vmem:[#allocation5 + $0x1b0] sm:$0xff]
    %v140 = vld [vmem:[#allocation5 + $0x1b8] sm:$0xff]
    %v141 = vld [vmem:[#allocation5 + $0x1c0] sm:$0xff]
    %v142 = vld [vmem:[#allocation5 + $0x1c8] sm:$0xff]
    %v143 = vld [vmem:[#allocation5 + $0x1d0] sm:$0xff]
    %v144 = vld [vmem:[#allocation5 + $0x1d8] sm:$0xff]
    %v145 = vld [vmem:[#allocation5 + $0x1e0] sm:$0xff]
    %v146 = vld [vmem:[#allocation5 + $0x1e8] sm:$0xff]
    %v147 = vld [vmem:[#allocation5 + $0x1f0] sm:$0xff]
    %v148 = vld [vmem:[#allocation5 + $0x1f8] sm:$0xff]
    %v149 = vld [vmem:[#allocation5 + $0x200] sm:$0xff]
    %v150 = vld [vmem:[#allocation5 + $0x208] sm:$0xff]
    %v151 = vld [vmem:[#allocation5 + $0x210] sm:$0xff]
    %v152 = vld [vmem:[#allocation5 + $0x218] sm:$0xff]
    %v153 = vld [vmem:[#allocation5 + $0x220] sm:$0xff]
    %v154 = vld [vmem:[#allocation5 + $0x228] sm:$0xff]
    %v155 = vld [vmem:[#allocation5 + $0x230] sm:$0xff]
    %v156 = vld [vmem:[#allocation5 + $0x238] sm:$0xff]
    %v157 = vld [vmem:[#allocation5 + $0x240] sm:$0xff]
    %v158 = vld [vmem:[#allocation5 + $0x248] sm:$0xff]
    %v159 = vld [vmem:[#allocation5 + $0x250] sm:$0xff]
    %v160 = vld [vmem:[#allocation5 + $0x258] sm:$0xff]
    %v161 = vld [vmem:[#allocation5 + $0x260] sm:$0xff]
    %v162 = vld [vmem:[#allocation5 + $0x268] sm:$0xff]
    %v163 = vld [vmem:[#allocation5 + $0x270] sm:$0xff]
    %v164 = vld [vmem:[#allocation5 + $0x278] sm:$0xff]
    %v165 = vld [vmem:[#allocation5 + $0x280] sm:$0xff]
    %v166 = vld [vmem:[#allocation5 + $0x288] sm:$0xff]
    %v167 = vld [vmem:[#allocation5 + $0x290] sm:$0xff]
    %v168 = vld [vmem:[#allocation5 + $0x298] sm:$0xff]
    %v169 = vld [vmem:[#allocation5 + $0x2a0] sm:$0xff]
    %v170 = vld [vmem:[#allocation5 + $0x2a8] sm:$0xff]
    %v171 = vld [vmem:[#allocation5 + $0x2b0] sm:$0xff]
    %v172 = vld [vmem:[#allocation5 + $0x2b8] sm:$0xff]
    %v173 = vld [vmem:[#allocation5 + $0x2c0] sm:$0xff]
    %v174 = vld [vmem:[#allocation5 + $0x2c8] sm:$0xff]
    %v175 = vld [vmem:[#allocation5 + $0x2d0] sm:$0xff]
    %v176 = vld [vmem:[#allocation5 + $0x2d8] sm:$0xff]
    %v177 = vld [vmem:[#allocation5 + $0x2e0] sm:$0xff]
    %v178 = vld [vmem:[#allocation5 + $0x2e8] sm:$0xff]
    %v179 = vld [vmem:[#allocation5 + $0x2f0] sm:$0xff]
    %v180 = vld [vmem:[#allocation5 + $0x2f8] sm:$0xff]
    %v181 = vld [vmem:[#allocation5 + $0x300] sm:$0xff]
    %v182 = vld [vmem:[#allocation5 + $0x308] sm:$0xff]
    %v183 = vld [vmem:[#allocation5 + $0x310] sm:$0xff]
    %v184 = vld [vmem:[#allocation5 + $0x318] sm:$0xff]
    %v185 = vld [vmem:[#allocation5 + $0x320] sm:$0xff]
    %v186 = vld [vmem:[#allocation5 + $0x328] sm:$0xff]
    %v187 = vld [vmem:[#allocation5 + $0x330] sm:$0xff]
    %v188 = vld [vmem:[#allocation5 + $0x338] sm:$0xff]
    %v189 = vld [vmem:[#allocation5 + $0x340] sm:$0xff]
    %v190 = vld [vmem:[#allocation5 + $0x348] sm:$0xff]
    %v191 = vld [vmem:[#allocation5 + $0x350] sm:$0xff]
    %v192 = vld [vmem:[#allocation5 + $0x358] sm:$0xff]
    %v193 = vld [vmem:[#allocation5 + $0x360] sm:$0xff]
    %v194 = vld [vmem:[#allocation5 + $0x368] sm:$0xff]
    %v195 = vld [vmem:[#allocation5 + $0x370] sm:$0xff]
    %v196 = vld [vmem:[#allocation5 + $0x378] sm:$0xff]
    %v197 = vld [vmem:[#allocation5 + $0x380] sm:$0xff]
    %v198 = vld [vmem:[#allocation5 + $0x388] sm:$0xff]
    %v199 = vld [vmem:[#allocation5 + $0x390] sm:$0xff]
    %v200 = vld [vmem:[#allocation5 + $0x398] sm:$0xff]
    %v201 = vld [vmem:[#allocation5 + $0x3a0] sm:$0xff]
    %v202 = vld [vmem:[#allocation5 + $0x3a8] sm:$0xff]
    %v203 = vld [vmem:[#allocation5 + $0x3b0] sm:$0xff]
    %v204 = vld [vmem:[#allocation5 + $0x3b8] sm:$0xff]
    %v205 = vld [vmem:[#allocation5 + $0x3c0] sm:$0xff]
    %v206 = vld [vmem:[#allocation5 + $0x3c8] sm:$0xff]
    %v207 = vld [vmem:[#allocation5 + $0x3d0] sm:$0xff]
    %v208 = vld [vmem:[#allocation5 + $0x3d8] sm:$0xff]
    %v209 = vld [vmem:[#allocation5 + $0x3e0] sm:$0xff]
    %v210 = vld [vmem:[#allocation5 + $0x3e8] sm:$0xff]
    %v211 = vld [vmem:[#allocation5 + $0x3f0] sm:$0xff]
    %v212 = vld [vmem:[#allocation5 + $0x3f8] sm:$0xff]
    %v213 = vld [vmem:[#allocation5 + $0x400] sm:$0xff]
    %v214 = vld [vmem:[#allocation5 + $0x408] sm:$0xff]
    %v215 = vld [vmem:[#allocation5 + $0x410] sm:$0xff]
    %v216 = vld [vmem:[#allocation5 + $0x418] sm:$0xff]
    %v217 = vld [vmem:[#allocation5 + $0x420] sm:$0xff]
    %v218 = vld [vmem:[#allocation5 + $0x428] sm:$0xff]
    %v219 = vld [vmem:[#allocation5 + $0x430] sm:$0xff]
    %v220 = vld [vmem:[#allocation5 + $0x438] sm:$0xff]
    %v221 = vld [vmem:[#allocation5 + $0x440] sm:$0xff]
    %v222 = vld [vmem:[#allocation5 + $0x448] sm:$0xff]
    %v223 = vld [vmem:[#allocation5 + $0x450] sm:$0xff]
    %v224 = vld [vmem:[#allocation5 + $0x458] sm:$0xff]
    %v225 = vld [vmem:[#allocation5 + $0x460] sm:$0xff]
    %v226 = vld [vmem:[#allocation5 + $0x468] sm:$0xff]
    %v227 = vld [vmem:[#allocation5 + $0x470] sm:$0xff]
    %v228 = vld [vmem:[#allocation5 + $0x478] sm:$0xff]
    %v229 = vld [vmem:[#allocation5 + $0x480] sm:$0xff]
    %v230 = vld [vmem:[#allocation5 + $0x488] sm:$0xff]
    %v231 = vld [vmem:[#allocation5 + $0x490] sm:$0xff]
    %v232 = vld [vmem:[#allocation5 + $0x498] sm:$0xff]
    %v233 = vld [vmem:[#allocation5 + $0x4a0] sm:$0xff]
    %v234 = vld [vmem:[#allocation5 + $0x4a8] sm:$0xff]
    %v235 = vld [vmem:[#allocation5 + $0x4b0] sm:$0xff]
    %v236 = vld [vmem:[#allocation5 + $0x4b8] sm:$0xff]
    %v237 = vld [vmem:[#allocation5 + $0x4c0] sm:$0xff]
    %v238 = vld [vmem:[#allocation5 + $0x4c8] sm:$0xff]
    %v239 = vld [vmem:[#allocation5 + $0x4d0] sm:$0xff]
    %v240 = vld [vmem:[#allocation5 + $0x4d8] sm:$0xff]
    %v241 = vld [vmem:[#allocation5 + $0x4e0] sm:$0xff]
    %v242 = vld [vmem:[#allocation5 + $0x4e8] sm:$0xff]
    %v243 = vld [vmem:[#allocation5 + $0x4f0] sm:$0xff]
    %v244 = vld [vmem:[#allocation5 + $0x4f8] sm:$0xff]
    %v245 = vld [vmem:[#allocation5 + $0x500] sm:$0xff]
    %v246 = vld [vmem:[#allocation5 + $0x508] sm:$0xff]
    %v247 = vld [vmem:[#allocation5 + $0x510] sm:$0xff]
    %v248 = vld [vmem:[#allocation5 + $0x518] sm:$0xff]
    %v249 = vld [vmem:[#allocation5 + $0x520] sm:$0xff]
    %v250 = vld [vmem:[#allocation5 + $0x528] sm:$0xff]
    %v251 = vld [vmem:[#allocation5 + $0x530] sm:$0xff]
    %v252 = vld [vmem:[#allocation5 + $0x538] sm:$0xff]
    %v253 = vld [vmem:[#allocation5 + $0x540] sm:$0xff]
    %v254 = vld [vmem:[#allocation5 + $0x548] sm:$0xff]
    %v255 = vld [vmem:[#allocation5 + $0x550] sm:$0xff]
    %v256 = vld [vmem:[#allocation5 + $0x558] sm:$0xff]
    %v257 = vld [vmem:[#allocation5 + $0x560] sm:$0xff]
    %v258 = vld [vmem:[#allocation5 + $0x568] sm:$0xff]
    %v259 = vld [vmem:[#allocation5 + $0x570] sm:$0xff]
    %v260 = vld [vmem:[#allocation5 + $0x578] sm:$0xff]
    %v261 = vld [vmem:[#allocation5 + $0x580] sm:$0xff]
    %v262 = vld [vmem:[#allocation5 + $0x588] sm:$0xff]
    %v263 = vld [vmem:[#allocation5 + $0x590] sm:$0xff]
    %v264 = vld [vmem:[#allocation5 + $0x598] sm:$0xff]
    %v265 = vld [vmem:[#allocation5 + $0x5a0] sm:$0xff]
    %v266 = vld [vmem:[#allocation5 + $0x5a8] sm:$0xff]
    %v267 = vld [vmem:[#allocation5 + $0x5b0] sm:$0xff]
    %v268 = vld [vmem:[#allocation5 + $0x5b8] sm:$0xff]
    %v269 = vld [vmem:[#allocation5 + $0x5c0] sm:$0xff]
    %v270 = vld [vmem:[#allocation5 + $0x5c8] sm:$0xff]
    %v271 = vld [vmem:[#allocation5 + $0x5d0] sm:$0xff]
    %v272 = vld [vmem:[#allocation5 + $0x5d8] sm:$0xff]
    %v273 = vld [vmem:[#allocation5 + $0x5e0] sm:$0xff]
    %v274 = vld [vmem:[#allocation5 + $0x5e8] sm:$0xff]
    %v275 = vld [vmem:[#allocation5 + $0x5f0] sm:$0xff]
    %v276 = vld [vmem:[#allocation5 + $0x5f8] sm:$0xff]
    %v277 = vld [vmem:[#allocation5 + $0x600] sm:$0xff]
    %v278 = vld [vmem:[#allocation5 + $0x608] sm:$0xff]
    %v279 = vld [vmem:[#allocation5 + $0x610] sm:$0xff]
    %v280 = vld [vmem:[#allocation5 + $0x618] sm:$0xff]
    %v281 = vld [vmem:[#allocation5 + $0x620] sm:$0xff]
    %v282 = vld [vmem:[#allocation5 + $0x628] sm:$0xff]
    %v283 = vld [vmem:[#allocation5 + $0x630] sm:$0xff]
    %v284 = vld [vmem:[#allocation5 + $0x638] sm:$0xff]
    %v285 = vld [vmem:[#allocation5 + $0x640] sm:$0xff]
    %v286 = vld [vmem:[#allocation5 + $0x648] sm:$0xff]
    %v287 = vld [vmem:[#allocation5 + $0x650] sm:$0xff]
    %v288 = vld [vmem:[#allocation5 + $0x658] sm:$0xff]
    %v289 = vld [vmem:[#allocation5 + $0x660] sm:$0xff]
    %v290 = vld [vmem:[#allocation5 + $0x668] sm:$0xff]
    %v291 = vld [vmem:[#allocation5 + $0x670] sm:$0xff]
    %v292 = vld [vmem:[#allocation5 + $0x678] sm:$0xff]
    %v293 = vld [vmem:[#allocation5 + $0x680] sm:$0xff]
    %v294 = vld [vmem:[#allocation5 + $0x688] sm:$0xff]
    %v295 = vld [vmem:[#allocation5 + $0x690] sm:$0xff]
    %v296 = vld [vmem:[#allocation5 + $0x698] sm:$0xff]
    %v297 = vld [vmem:[#allocation5 + $0x6a0] sm:$0xff]
    %v298 = vld [vmem:[#allocation5 + $0x6a8] sm:$0xff]
    %v299 = vld [vmem:[#allocation5 + $0x6b0] sm:$0xff]
    %v300 = vld [vmem:[#allocation5 + $0x6b8] sm:$0xff]
    %v301 = vld [vmem:[#allocation5 + $0x6c0] sm:$0xff]
    %v302 = vld [vmem:[#allocation5 + $0x6c8] sm:$0xff]
    %v303 = vld [vmem:[#allocation5 + $0x6d0] sm:$0xff]
    %v304 = vld [vmem:[#allocation5 + $0x6d8] sm:$0xff]
    %v305 = vld [vmem:[#allocation5 + $0x6e0] sm:$0xff]
    %v306 = vld [vmem:[#allocation5 + $0x6e8] sm:$0xff]
    %v307 = vld [vmem:[#allocation5 + $0x6f0] sm:$0xff]
    %v308 = vld [vmem:[#allocation5 + $0x6f8] sm:$0xff]
    %v309 = vld [vmem:[#allocation5 + $0x700] sm:$0xff]
    %v310 = vld [vmem:[#allocation5 + $0x708] sm:$0xff]
    %v311 = vld [vmem:[#allocation5 + $0x710] sm:$0xff]
    %v312 = vld [vmem:[#allocation5 + $0x718] sm:$0xff]
    %v313 = vld [vmem:[#allocation5 + $0x720] sm:$0xff]
    %v314 = vld [vmem:[#allocation5 + $0x728] sm:$0xff]
    %v315 = vld [vmem:[#allocation5 + $0x730] sm:$0xff]
    %v316 = vld [vmem:[#allocation5 + $0x738] sm:$0xff]
    %v317 = vld [vmem:[#allocation5 + $0x740] sm:$0xff]
    %v318 = vld [vmem:[#allocation5 + $0x748] sm:$0xff]
    %v319 = vld [vmem:[#allocation5 + $0x750] sm:$0xff]
    %v320 = vld [vmem:[#allocation5 + $0x758] sm:$0xff]
    %v321 = vld [vmem:[#allocation5 + $0x760] sm:$0xff]
    %v322 = vld [vmem:[#allocation5 + $0x768] sm:$0xff]
    %v323 = vld [vmem:[#allocation5 + $0x770] sm:$0xff]
    %v324 = vld [vmem:[#allocation5 + $0x778] sm:$0xff]
    %v325 = vld [vmem:[#allocation5 + $0x780] sm:$0xff]
    %v326 = vld [vmem:[#allocation5 + $0x788] sm:$0xff]
    %v327 = vld [vmem:[#allocation5 + $0x790] sm:$0xff]
    %v328 = vld [vmem:[#allocation5 + $0x798] sm:$0xff]
    %v329 = vld [vmem:[#allocation5 + $0x7a0] sm:$0xff]
    %v330 = vld [vmem:[#allocation5 + $0x7a8] sm:$0xff]
    %v331 = vld [vmem:[#allocation5 + $0x7b0] sm:$0xff]
    %v332 = vld [vmem:[#allocation5 + $0x7b8] sm:$0xff]
    %v333 = vld [vmem:[#allocation5 + $0x7c0] sm:$0xff]
    %v334 = vld [vmem:[#allocation5 + $0x7c8] sm:$0xff]
    %v335 = vld [vmem:[#allocation5 + $0x7d0] sm:$0xff]
    %v336 = vld [vmem:[#allocation5 + $0x7d8] sm:$0xff]
    %v337 = vld [vmem:[#allocation5 + $0x7e0] sm:$0xff]
    %v338 = vld [vmem:[#allocation5 + $0x7e8] sm:$0xff]
    %v339 = vld [vmem:[#allocation5 + $0x7f0] sm:$0xff]
    %v340 = vld [vmem:[#allocation5 + $0x7f8] sm:$0xff]
    %v341 = vld [vmem:[#allocation5 + $0x800] sm:$0xff]
    %v342 = vld [vmem:[#allocation5 + $0x808] sm:$0xff]
    %v343 = vld [vmem:[#allocation5 + $0x810] sm:$0xff]
    %v344 = vld [vmem:[#allocation5 + $0x818] sm:$0xff]
    %v345 = vld [vmem:[#allocation5 + $0x820] sm:$0xff]
    %v346 = vld [vmem:[#allocation5 + $0x828] sm:$0xff]
    %v347 = vld [vmem:[#allocation5 + $0x830] sm:$0xff]
    %v348 = vld [vmem:[#allocation5 + $0x838] sm:$0xff]
    %v349 = vld [vmem:[#allocation5 + $0x840] sm:$0xff]
    %v350 = vld [vmem:[#allocation5 + $0x848] sm:$0xff]
    %v351 = vld [vmem:[#allocation5 + $0x850] sm:$0xff]
    %v352 = vld [vmem:[#allocation5 + $0x858] sm:$0xff]
    %v353 = vld [vmem:[#allocation5 + $0x860] sm:$0xff]
    %v354 = vld [vmem:[#allocation5 + $0x868] sm:$0xff]
    %v355 = vld [vmem:[#allocation5 + $0x870] sm:$0xff]
    %v356 = vld [vmem:[#allocation5 + $0x878] sm:$0xff]
    %v357 = vld [vmem:[#allocation5 + $0x880] sm:$0xff]
    %v358 = vld [vmem:[#allocation5 + $0x888] sm:$0xff]
    %v359 = vld [vmem:[#allocation5 + $0x890] sm:$0xff]
    %v360 = vld [vmem:[#allocation5 + $0x898] sm:$0xff]
    %v361 = vld [vmem:[#allocation5 + $0x8a0] sm:$0xff]
    %v362 = vld [vmem:[#allocation5 + $0x8a8] sm:$0xff]
    %v363 = vld [vmem:[#allocation5 + $0x8b0] sm:$0xff]
    %v364 = vld [vmem:[#allocation5 + $0x8b8] sm:$0xff]
    %v365 = vld [vmem:[#allocation5 + $0x8c0] sm:$0xff]
    %v366 = vld [vmem:[#allocation5 + $0x8c8] sm:$0xff]
    %v367 = vld [vmem:[#allocation5 + $0x8d0] sm:$0xff]
    %v368 = vld [vmem:[#allocation5 + $0x8d8] sm:$0xff]
    %v369 = vld [vmem:[#allocation5 + $0x8e0] sm:$0xff]
    %v370 = vld [vmem:[#allocation5 + $0x8e8] sm:$0xff]
    %v371 = vld [vmem:[#allocation5 + $0x8f0] sm:$0xff]
    %v372 = vld [vmem:[#allocation5 + $0x8f8] sm:$0xff]
    %v373 = vld [vmem:[#allocation5 + $0x900] sm:$0xff]
    %v374 = vld [vmem:[#allocation5 + $0x908] sm:$0xff]
    %v375 = vld [vmem:[#allocation5 + $0x910] sm:$0xff]
    %v376 = vld [vmem:[#allocation5 + $0x918] sm:$0xff]
    %v377 = vld [vmem:[#allocation5 + $0x920] sm:$0xff]
    %v378 = vld [vmem:[#allocation5 + $0x928] sm:$0xff]
    %v379 = vld [vmem:[#allocation5 + $0x930] sm:$0xff]
    %v380 = vld [vmem:[#allocation5 + $0x938] sm:$0xff]
    %v381 = vld [vmem:[#allocation5 + $0x940] sm:$0xff]
    %v382 = vld [vmem:[#allocation5 + $0x948] sm:$0xff]
    %v383 = vld [vmem:[#allocation5 + $0x950] sm:$0xff]
    %v384 = vld [vmem:[#allocation5 + $0x958] sm:$0xff]
    %v385 = vld [vmem:[#allocation5 + $0x960] sm:$0xff]
    %v386 = vld [vmem:[#allocation5 + $0x968] sm:$0xff]
    %v387 = vld [vmem:[#allocation5 + $0x970] sm:$0xff]
    %v388 = vld [vmem:[#allocation5 + $0x978] sm:$0xff]
    %v389 = vld [vmem:[#allocation5 + $0x980] sm:$0xff]
    %v390 = vld [vmem:[#allocation5 + $0x988] sm:$0xff]
    %v391 = vld [vmem:[#allocation5 + $0x990] sm:$0xff]
    %v392 = vld [vmem:[#allocation5 + $0x998] sm:$0xff]
    %v393 = vld [vmem:[#allocation5 + $0x9a0] sm:$0xff]
    %v394 = vld [vmem:[#allocation5 + $0x9a8] sm:$0xff]
    %v395 = vld [vmem:[#allocation5 + $0x9b0] sm:$0xff]
    %v396 = vld [vmem:[#allocation5 + $0x9b8] sm:$0xff]
    %v397 = vld [vmem:[#allocation5 + $0x9c0] sm:$0xff]
    %v398 = vld [vmem:[#allocation5 + $0x9c8] sm:$0xff]
    %v399 = vld [vmem:[#allocation5 + $0x9d0] sm:$0xff]
    %v400 = vld [vmem:[#allocation5 + $0x9d8] sm:$0xff]
    %v401 = vld [vmem:[#allocation5 + $0x9e0] sm:$0xff]
    %v402 = vld [vmem:[#allocation5 + $0x9e8] sm:$0xff]
    %v403 = vld [vmem:[#allocation5 + $0x9f0] sm:$0xff]
    %v404 = vld [vmem:[#allocation5 + $0x9f8] sm:$0xff]
    %v405 = vld [vmem:[#allocation5 + $0xa00] sm:$0xff]
    %v406 = vld [vmem:[#allocation5 + $0xa08] sm:$0xff]
    %v407 = vld [vmem:[#allocation5 + $0xa10] sm:$0xff]
    %v408 = vld [vmem:[#allocation5 + $0xa18] sm:$0xff]
    %v409 = vld [vmem:[#allocation5 + $0xa20] sm:$0xff]
    %v410 = vld [vmem:[#allocation5 + $0xa28] sm:$0xff]
    %v411 = vld [vmem:[#allocation5 + $0xa30] sm:$0xff]
    %v412 = vld [vmem:[#allocation5 + $0xa38] sm:$0xff]
    %v413 = vld [vmem:[#allocation5 + $0xa40] sm:$0xff]
    %v414 = vld [vmem:[#allocation5 + $0xa48] sm:$0xff]
    %v415 = vld [vmem:[#allocation5 + $0xa50] sm:$0xff]
    %v416 = vld [vmem:[#allocation5 + $0xa58] sm:$0xff]
    %v417 = vld [vmem:[#allocation5 + $0xa60] sm:$0xff]
    %v418 = vld [vmem:[#allocation5 + $0xa68] sm:$0xff]
    %v419 = vld [vmem:[#allocation5 + $0xa70] sm:$0xff]
    %v420 = vld [vmem:[#allocation5 + $0xa78] sm:$0xff]
    %v421 = vld [vmem:[#allocation5 + $0xa80] sm:$0xff]
    %v422 = vld [vmem:[#allocation5 + $0xa88] sm:$0xff]
    %v423 = vld [vmem:[#allocation5 + $0xa90] sm:$0xff]
    %v424 = vld [vmem:[#allocation5 + $0xa98] sm:$0xff]
    %v425 = vld [vmem:[#allocation5 + $0xaa0] sm:$0xff]
    %v426 = vld [vmem:[#allocation5 + $0xaa8] sm:$0xff]
    %v427 = vld [vmem:[#allocation5 + $0xab0] sm:$0xff]
    %v428 = vld [vmem:[#allocation5 + $0xab8] sm:$0xff]
    %v429 = vld [vmem:[#allocation5 + $0xac0] sm:$0xff]
    %v430 = vld [vmem:[#allocation5 + $0xac8] sm:$0xff]
    %v431 = vld [vmem:[#allocation5 + $0xad0] sm:$0xff]
    %v432 = vld [vmem:[#allocation5 + $0xad8] sm:$0xff]
    %v433 = vld [vmem:[#allocation5 + $0xae0] sm:$0xff]
    %v434 = vld [vmem:[#allocation5 + $0xae8] sm:$0xff]
    %v435 = vld [vmem:[#allocation5 + $0xaf0] sm:$0xff]
    %v436 = vld [vmem:[#allocation5 + $0xaf8] sm:$0xff]
    %v437 = vld [vmem:[#allocation5 + $0xb00] sm:$0xff]
    %v438 = vld [vmem:[#allocation5 + $0xb08] sm:$0xff]
    %v439 = vld [vmem:[#allocation5 + $0xb10] sm:$0xff]
    %v440 = vld [vmem:[#allocation5 + $0xb18] sm:$0xff]
    %v441 = vld [vmem:[#allocation5 + $0xb20] sm:$0xff]
    %v442 = vld [vmem:[#allocation5 + $0xb28] sm:$0xff]
    %v443 = vld [vmem:[#allocation5 + $0xb30] sm:$0xff]
    %v444 = vld [vmem:[#allocation5 + $0xb38] sm:$0xff]
    %v445 = vld [vmem:[#allocation5 + $0xb40] sm:$0xff]
    %v446 = vld [vmem:[#allocation5 + $0xb48] sm:$0xff]
    %v447 = vld [vmem:[#allocation5 + $0xb50] sm:$0xff]
    %v448 = vld [vmem:[#allocation5 + $0xb58] sm:$0xff]
    %v449 = vld [vmem:[#allocation5 + $0xb60] sm:$0xff]
    %v450 = vld [vmem:[#allocation5 + $0xb68] sm:$0xff]
    %v451 = vld [vmem:[#allocation5 + $0xb70] sm:$0xff]
    %v452 = vld [vmem:[#allocation5 + $0xb78] sm:$0xff]
    %v453 = vld [vmem:[#allocation5 + $0xb80] sm:$0xff]
    %v454 = vld [vmem:[#allocation5 + $0xb88] sm:$0xff]
    %v455 = vld [vmem:[#allocation5 + $0xb90] sm:$0xff]
    %v456 = vld [vmem:[#allocation5 + $0xb98] sm:$0xff]
    %v457 = vld [vmem:[#allocation5 + $0xba0] sm:$0xff]
    %v458 = vld [vmem:[#allocation5 + $0xba8] sm:$0xff]
    %v459 = vld [vmem:[#allocation5 + $0xbb0] sm:$0xff]
    %v460 = vld [vmem:[#allocation5 + $0xbb8] sm:$0xff]
    %v461 = vld [vmem:[#allocation5 + $0xbc0] sm:$0xff]
    %v462 = vld [vmem:[#allocation5 + $0xbc8] sm:$0xff]
    %v463 = vld [vmem:[#allocation5 + $0xbd0] sm:$0xff]
    %v464 = vld [vmem:[#allocation5 + $0xbd8] sm:$0xff]
    %v465 = vld [vmem:[#allocation5 + $0xbe0] sm:$0xff]
    %v466 = vld [vmem:[#allocation5 + $0xbe8] sm:$0xff]
    %v467 = vld [vmem:[#allocation5 + $0xbf0] sm:$0xff]
    %v468 = vld [vmem:[#allocation5 + $0xbf8] sm:$0xff]
    %v469 = vld [vmem:[#allocation5 + $0xc00] sm:$0xff]
    %v470 = vld [vmem:[#allocation5 + $0xc08] sm:$0xff]
    %v471 = vld [vmem:[#allocation5 + $0xc10] sm:$0xff]
    %v472 = vld [vmem:[#allocation5 + $0xc18] sm:$0xff]
    %v473 = vld [vmem:[#allocation5 + $0xc20] sm:$0xff]
    %v474 = vld [vmem:[#allocation5 + $0xc28] sm:$0xff]
    %v475 = vld [vmem:[#allocation5 + $0xc30] sm:$0xff]
    %v476 = vld [vmem:[#allocation5 + $0xc38] sm:$0xff]
    %v477 = vld [vmem:[#allocation5 + $0xc40] sm:$0xff]
    %v478 = vld [vmem:[#allocation5 + $0xc48] sm:$0xff]
    %v479 = vld [vmem:[#allocation5 + $0xc50] sm:$0xff]
    %v480 = vld [vmem:[#allocation5 + $0xc58] sm:$0xff]
    %v481 = vld [vmem:[#allocation5 + $0xc60] sm:$0xff]
    %v482 = vld [vmem:[#allocation5 + $0xc68] sm:$0xff]
    %v483 = vld [vmem:[#allocation5 + $0xc70] sm:$0xff]
    %v484 = vld [vmem:[#allocation5 + $0xc78] sm:$0xff]
    %v485 = vld [vmem:[#allocation5 + $0xc80] sm:$0xff]
    %v486 = vld [vmem:[#allocation5 + $0xc88] sm:$0xff]
    %v487 = vld [vmem:[#allocation5 + $0xc90] sm:$0xff]
    %v488 = vld [vmem:[#allocation5 + $0xc98] sm:$0xff]
    %v489 = vld [vmem:[#allocation5 + $0xca0] sm:$0xff]
    %v490 = vld [vmem:[#allocation5 + $0xca8] sm:$0xff]
    %v491 = vld [vmem:[#allocation5 + $0xcb0] sm:$0xff]
    %v492 = vld [vmem:[#allocation5 + $0xcb8] sm:$0xff]
    %v493 = vld [vmem:[#allocation5 + $0xcc0] sm:$0xff]
    %v494 = vld [vmem:[#allocation5 + $0xcc8] sm:$0xff]
    %v495 = vld [vmem:[#allocation5 + $0xcd0] sm:$0xff]
    %v496 = vld [vmem:[#allocation5 + $0xcd8] sm:$0xff]
    %v497 = vld [vmem:[#allocation5 + $0xce0] sm:$0xff]
    %v498 = vld [vmem:[#allocation5 + $0xce8] sm:$0xff]
    %v499 = vld [vmem:[#allocation5 + $0xcf0] sm:$0xff]
    %v500 = vld [vmem:[#allocation5 + $0xcf8] sm:$0xff]
    %v501 = vld [vmem:[#allocation5 + $0xd00] sm:$0xff]
    %v502 = vld [vmem:[#allocation5 + $0xd08] sm:$0xff]
    %v503 = vld [vmem:[#allocation5 + $0xd10] sm:$0xff]
    %v504 = vld [vmem:[#allocation5 + $0xd18] sm:$0xff]
    %v505 = vld [vmem:[#allocation5 + $0xd20] sm:$0xff]
    %v506 = vld [vmem:[#allocation5 + $0xd28] sm:$0xff]
    %v507 = vld [vmem:[#allocation5 + $0xd30] sm:$0xff]
    %v508 = vld [vmem:[#allocation5 + $0xd38] sm:$0xff]
    %v509 = vld [vmem:[#allocation5 + $0xd40] sm:$0xff]
    %v510 = vld [vmem:[#allocation5 + $0xd48] sm:$0xff]
    %v511 = vld [vmem:[#allocation5 + $0xd50] sm:$0xff]
    %v512 = vld [vmem:[#allocation5 + $0xd58] sm:$0xff]
    %v513 = vld [vmem:[#allocation5 + $0xd60] sm:$0xff]
    %v514 = vld [vmem:[#allocation5 + $0xd68] sm:$0xff]
    %v515 = vld [vmem:[#allocation5 + $0xd70] sm:$0xff]
    %v516 = vld [vmem:[#allocation5 + $0xd78] sm:$0xff]
    %v517 = vld [vmem:[#allocation5 + $0xd80] sm:$0xff]
    %v518 = vld [vmem:[#allocation5 + $0xd88] sm:$0xff]
    %v519 = vld [vmem:[#allocation5 + $0xd90] sm:$0xff]
    %v520 = vld [vmem:[#allocation5 + $0xd98] sm:$0xff]
    %v521 = vld [vmem:[#allocation5 + $0xda0] sm:$0xff]
    %v522 = vld [vmem:[#allocation5 + $0xda8] sm:$0xff]
    %v523 = vld [vmem:[#allocation5 + $0xdb0] sm:$0xff]
    %v524 = vld [vmem:[#allocation5 + $0xdb8] sm:$0xff]
    %v525 = vld [vmem:[#allocation5 + $0xdc0] sm:$0xff]
    %v526 = vld [vmem:[#allocation5 + $0xdc8] sm:$0xff]
    %v527 = vld [vmem:[#allocation5 + $0xdd0] sm:$0xff]
    %v528 = vld [vmem:[#allocation5 + $0xdd8] sm:$0xff]
    %v529 = vld [vmem:[#allocation5 + $0xde0] sm:$0xff]
    %v530 = vld [vmem:[#allocation5 + $0xde8] sm:$0xff]
    %v531 = vld [vmem:[#allocation5 + $0xdf0] sm:$0xff]
    %v532 = vld [vmem:[#allocation5 + $0xdf8] sm:$0xff]
    %v533 = vld [vmem:[#allocation5 + $0xe00] sm:$0xff]
    %v534 = vld [vmem:[#allocation5 + $0xe08] sm:$0xff]
    %v535 = vld [vmem:[#allocation5 + $0xe10] sm:$0xff]
    %v536 = vld [vmem:[#allocation5 + $0xe18] sm:$0xff]
    %v537 = vld [vmem:[#allocation5 + $0xe20] sm:$0xff]
    %v538 = vld [vmem:[#allocation5 + $0xe28] sm:$0xff]
    %v539 = vld [vmem:[#allocation5 + $0xe30] sm:$0xff]
    %v540 = vld [vmem:[#allocation5 + $0xe38] sm:$0xff]
    %v541 = vld [vmem:[#allocation5 + $0xe40] sm:$0xff]
    %v542 = vld [vmem:[#allocation5 + $0xe48] sm:$0xff]
    %v543 = vld [vmem:[#allocation5 + $0xe50] sm:$0xff]
    %v544 = vld [vmem:[#allocation5 + $0xe58] sm:$0xff]
    %v545 = vld [vmem:[#allocation5 + $0xe60] sm:$0xff]
    %v546 = vld [vmem:[#allocation5 + $0xe68] sm:$0xff]
    %v547 = vld [vmem:[#allocation5 + $0xe70] sm:$0xff]
    %v548 = vld [vmem:[#allocation5 + $0xe78] sm:$0xff]
    %v549 = vld [vmem:[#allocation5 + $0xe80] sm:$0xff]
    %v550 = vld [vmem:[#allocation5 + $0xe88] sm:$0xff]
    %v551 = vld [vmem:[#allocation5 + $0xe90] sm:$0xff]
    %v552 = vld [vmem:[#allocation5 + $0xe98] sm:$0xff]
    %v553 = vld [vmem:[#allocation5 + $0xea0] sm:$0xff]
    %v554 = vld [vmem:[#allocation5 + $0xea8] sm:$0xff]
    %v555 = vld [vmem:[#allocation5 + $0xeb0] sm:$0xff]
    %v556 = vld [vmem:[#allocation5 + $0xeb8] sm:$0xff]
    %v557 = vld [vmem:[#allocation5 + $0xec0] sm:$0xff]
    %v558 = vld [vmem:[#allocation5 + $0xec8] sm:$0xff]
    %v559 = vld [vmem:[#allocation5 + $0xed0] sm:$0xff]
    %v560 = vld [vmem:[#allocation5 + $0xed8] sm:$0xff]
    %v561 = vld [vmem:[#allocation5 + $0xee0] sm:$0xff]
    %v562 = vld [vmem:[#allocation5 + $0xee8] sm:$0xff]
    %v563 = vld [vmem:[#allocation5 + $0xef0] sm:$0xff]
    %v564 = vld [vmem:[#allocation5 + $0xef8] sm:$0xff]
    %v565 = vld [vmem:[#allocation5 + $0xf00] sm:$0xff]
    %v566 = vld [vmem:[#allocation5 + $0xf08] sm:$0xff]
    %v567 = vld [vmem:[#allocation5 + $0xf10] sm:$0xff]
    %v568 = vld [vmem:[#allocation5 + $0xf18] sm:$0xff]
    %v569 = vld [vmem:[#allocation5 + $0xf20] sm:$0xff]
    %v570 = vld [vmem:[#allocation5 + $0xf28] sm:$0xff]
    %v571 = vld [vmem:[#allocation5 + $0xf30] sm:$0xff]
    %v572 = vld [vmem:[#allocation5 + $0xf38] sm:$0xff]
    %v573 = vld [vmem:[#allocation5 + $0xf40] sm:$0xff]
    %v574 = vld [vmem:[#allocation5 + $0xf48] sm:$0xff]
    %v575 = vld [vmem:[#allocation5 + $0xf50] sm:$0xff]
    %v576 = vld [vmem:[#allocation5 + $0xf58] sm:$0xff]
    %v577 = vld [vmem:[#allocation5 + $0xf60] sm:$0xff]
    %v578 = vld [vmem:[#allocation5 + $0xf68] sm:$0xff]
    %v579 = vld [vmem:[#allocation5 + $0xf70] sm:$0xff]
    %v580 = vld [vmem:[#allocation5 + $0xf78] sm:$0xff]
    %v581 = vld [vmem:[#allocation5 + $0xf80] sm:$0xff]
    %v582 = vld [vmem:[#allocation5 + $0xf88] sm:$0xff]
    %v583 = vld [vmem:[#allocation5 + $0xf90] sm:$0xff]
    %v584 = vld [vmem:[#allocation5 + $0xf98] sm:$0xff]
    %v585 = vld [vmem:[#allocation5 + $0xfa0] sm:$0xff]
    %v586 = vld [vmem:[#allocation5 + $0xfa8] sm:$0xff]
    %v587 = vld [vmem:[#allocation5 + $0xfb0] sm:$0xff]
    %v588 = vld [vmem:[#allocation5 + $0xfb8] sm:$0xff]
    %v589 = vld [vmem:[#allocation5 + $0xfc0] sm:$0xff]
    %v590 = vld [vmem:[#allocation5 + $0xfc8] sm:$0xff]
    %v591 = vld [vmem:[#allocation5 + $0xfd0] sm:$0xff]
    %v592 = vld [vmem:[#allocation5 + $0xfd8] sm:$0xff]
    %v593 = vld [vmem:[#allocation5 + $0xfe0] sm:$0xff]
    %v594 = vld [vmem:[#allocation5 + $0xfe8] sm:$0xff]
    %v595 = vld [vmem:[#allocation5 + $0xff0] sm:$0xff]
    %v596 = vld [vmem:[#allocation5 + $0xff8] sm:$0xff]
    %v597 = vld [vmem:[#allocation7] sm:$0xf]
    %v599 = vperm.slane %v597, 0
    %v600 = vperm.slane %v597, 1
    %v601 = vperm.slane %v597, 2
    %v602 = vperm.slane %v597, 3
    %607 = vmatpush.msra.mxu0 %v145
    %608 = vmatpush.msra.mxu0 %v141
    %609 = vmatpush.msra.mxu0 %v137
    %610 = vmatpush.msra.mxu0 %v133
    %611 = vmatpush.msra.mxu0 %v129
    %612 = vmatpush.msra.mxu0 %v125
    %613 = vmatpush.msra.mxu0 %v121
    %614 = vmatpush.msra.mxu0 %v117
    %615 = vmatpush.msra.mxu0 %v113
    %616 = vmatpush.msra.mxu0 %v109
    %617 = vmatpush.msra.mxu0 %v105
    %618 = vmatpush.msra.mxu0 %v101
    %619 = vmatpush.msra.mxu0 %v97
    %620 = vmatpush.msra.mxu0 %v93
    %621 = vmatpush.msra.mxu0 %v89
    %622 = vmatpush.msra.mxu0 %v85
    %623 = vmatmul.f32.gmra.mxu0 %v77
    %v624 = vpop.f32.mrf.mxu0
    %v625 = vadd.f32 %v599, %v624
    %626 = vdwg.mxu0
    %627 = vmatpush.msra.mxu0 %v209
    %628 = vmatpush.msra.mxu0 %v205
    %629 = vmatpush.msra.mxu0 %v201
    %630 = vmatpush.msra.mxu0 %v197
    %631 = vmatpush.msra.mxu0 %v193
    %632 = vmatpush.msra.mxu0 %v189
    %633 = vmatpush.msra.mxu0 %v185
    %634 = vmatpush.msra.mxu0 %v181
    %635 = vmatpush.msra.mxu0 %v177
    %636 = vmatpush.msra.mxu0 %v173
    %637 = vmatpush.msra.mxu0 %v169
    %638 = vmatpush.msra.mxu0 %v165
    %639 = vmatpush.msra.mxu0 %v161
    %640 = vmatpush.msra.mxu0 %v157
    %641 = vmatpush.msra.mxu0 %v153
    %642 = vmatpush.msra.mxu0 %v149
    %643 = vmatmul.f32.gmra.mxu0 %v78
    %v644 = vpop.f32.mrf.mxu0
    %v645 = vadd.f32 %v625, %v644
    %646 = vdwg.mxu0
    %647 = vmatpush.msra.mxu0 %v273
    %648 = vmatpush.msra.mxu0 %v269
    %649 = vmatpush.msra.mxu0 %v265
    %650 = vmatpush.msra.mxu0 %v261
    %651 = vmatpush.msra.mxu0 %v257
    %652 = vmatpush.msra.mxu0 %v253
    %653 = vmatpush.msra.mxu0 %v249
    %654 = vmatpush.msra.mxu0 %v245
    %655 = vmatpush.msra.mxu0 %v241
    %656 = vmatpush.msra.mxu0 %v237
    %657 = vmatpush.msra.mxu0 %v233
    %658 = vmatpush.msra.mxu0 %v229
    %659 = vmatpush.msra.mxu0 %v225
    %660 = vmatpush.msra.mxu0 %v221
    %661 = vmatpush.msra.mxu0 %v217
    %662 = vmatpush.msra.mxu0 %v213
    %663 = vmatmul.f32.gmra.mxu0 %v79
    %v664 = vpop.f32.mrf.mxu0
    %v665 = vadd.f32 %v645, %v664
    %666 = vdwg.mxu0
    %667 = vmatpush.msra.mxu0 %v337
    %668 = vmatpush.msra.mxu0 %v333
    %669 = vmatpush.msra.mxu0 %v329
    %670 = vmatpush.msra.mxu0 %v325
    %671 = vmatpush.msra.mxu0 %v321
    %672 = vmatpush.msra.mxu0 %v317
    %673 = vmatpush.msra.mxu0 %v313
    %674 = vmatpush.msra.mxu0 %v309
    %675 = vmatpush.msra.mxu0 %v305
    %676 = vmatpush.msra.mxu0 %v301
    %677 = vmatpush.msra.mxu0 %v297
    %678 = vmatpush.msra.mxu0 %v293
    %679 = vmatpush.msra.mxu0 %v289
    %680 = vmatpush.msra.mxu0 %v285
    %681 = vmatpush.msra.mxu0 %v281
    %682 = vmatpush.msra.mxu0 %v277
    %683 = vmatmul.f32.gmra.mxu0 %v80
    %v684 = vpop.f32.mrf.mxu0
    %v685 = vadd.f32 %v665, %v684
    %686 = vdwg.mxu0
    %687 = vmatpush.msra.mxu0 %v401
    %688 = vmatpush.msra.mxu0 %v397
    %689 = vmatpush.msra.mxu0 %v393
    %690 = vmatpush.msra.mxu0 %v389
    %691 = vmatpush.msra.mxu0 %v385
    %692 = vmatpush.msra.mxu0 %v381
    %693 = vmatpush.msra.mxu0 %v377
    %694 = vmatpush.msra.mxu0 %v373
    %695 = vmatpush.msra.mxu0 %v369
    %696 = vmatpush.msra.mxu0 %v365
    %697 = vmatpush.msra.mxu0 %v361
    %698 = vmatpush.msra.mxu0 %v357
    %699 = vmatpush.msra.mxu0 %v353
    %700 = vmatpush.msra.mxu0 %v349
    %701 = vmatpush.msra.mxu0 %v345
    %702 = vmatpush.msra.mxu0 %v341
    %703 = vmatmul.f32.gmra.mxu0 %v81
    %v704 = vpop.f32.mrf.mxu0
    %v705 = vadd.f32 %v685, %v704
    %706 = vdwg.mxu0
    %707 = vmatpush.msra.mxu0 %v465
    %708 = vmatpush.msra.mxu0 %v461
    %709 = vmatpush.msra.mxu0 %v457
    %710 = vmatpush.msra.mxu0 %v453
    %711 = vmatpush.msra.mxu0 %v449
    %712 = vmatpush.msra.mxu0 %v445
    %713 = vmatpush.msra.mxu0 %v441
    %714 = vmatpush.msra.mxu0 %v437
    %715 = vmatpush.msra.mxu0 %v433
    %716 = vmatpush.msra.mxu0 %v429
    %717 = vmatpush.msra.mxu0 %v425
    %718 = vmatpush.msra.mxu0 %v421
    %719 = vmatpush.msra.mxu0 %v417
    %720 = vmatpush.msra.mxu0 %v413
    %721 = vmatpush.msra.mxu0 %v409
    %722 = vmatpush.msra.mxu0 %v405
    %723 = vmatmul.f32.gmra.mxu0 %v82
    %v724 = vpop.f32.mrf.mxu0
    %v725 = vadd.f32 %v705, %v724
    %726 = vdwg.mxu0
    %727 = vmatpush.msra.mxu0 %v529
    %728 = vmatpush.msra.mxu0 %v525
    %729 = vmatpush.msra.mxu0 %v521
    %730 = vmatpush.msra.mxu0 %v517
    %731 = vmatpush.msra.mxu0 %v513
    %732 = vmatpush.msra.mxu0 %v509
    %733 = vmatpush.msra.mxu0 %v505
    %734 = vmatpush.msra.mxu0 %v501
    %735 = vmatpush.msra.mxu0 %v497
    %736 = vmatpush.msra.mxu0 %v493
    %737 = vmatpush.msra.mxu0 %v489
    %738 = vmatpush.msra.mxu0 %v485
    %739 = vmatpush.msra.mxu0 %v481
    %740 = vmatpush.msra.mxu0 %v477
    %741 = vmatpush.msra.mxu0 %v473
    %742 = vmatpush.msra.mxu0 %v469
    %743 = vmatmul.f32.gmra.mxu0 %v83
    %v744 = vpop.f32.mrf.mxu0
    %v745 = vadd.f32 %v725, %v744
    %746 = vdwg.mxu0
    %747 = vmatpush.msra.mxu0 %v593
    %748 = vmatpush.msra.mxu0 %v589
    %749 = vmatpush.msra.mxu0 %v585
    %750 = vmatpush.msra.mxu0 %v581
    %751 = vmatpush.msra.mxu0 %v577
    %752 = vmatpush.msra.mxu0 %v573
    %753 = vmatpush.msra.mxu0 %v569
    %754 = vmatpush.msra.mxu0 %v565
    %755 = vmatpush.msra.mxu0 %v561
    %756 = vmatpush.msra.mxu0 %v557
    %757 = vmatpush.msra.mxu0 %v553
    %758 = vmatpush.msra.mxu0 %v549
    %759 = vmatpush.msra.mxu0 %v545
    %760 = vmatpush.msra.mxu0 %v541
    %761 = vmatpush.msra.mxu0 %v537
    %762 = vmatpush.msra.mxu0 %v533
    %763 = vmatmul.f32.gmra.mxu0 %v84
    %v764 = vpop.f32.mrf.mxu0
    %v765 = vadd.f32 %v745, %v764
    %766 = vdwg.mxu0
    %767 = vmatpush.msra.mxu0 %v146
    %768 = vmatpush.msra.mxu0 %v142
    %769 = vmatpush.msra.mxu0 %v138
    %770 = vmatpush.msra.mxu0 %v134
    %771 = vmatpush.msra.mxu0 %v130
    %772 = vmatpush.msra.mxu0 %v126
    %773 = vmatpush.msra.mxu0 %v122
    %774 = vmatpush.msra.mxu0 %v118
    %775 = vmatpush.msra.mxu0 %v114
    %776 = vmatpush.msra.mxu0 %v110
    %777 = vmatpush.msra.mxu0 %v106
    %778 = vmatpush.msra.mxu0 %v102
    %779 = vmatpush.msra.mxu0 %v98
    %780 = vmatpush.msra.mxu0 %v94
    %781 = vmatpush.msra.mxu0 %v90
    %782 = vmatpush.msra.mxu0 %v86
    %783 = vmatmul.f32.gmra.mxu0 %v77
    %v784 = vpop.f32.mrf.mxu0
    %v785 = vadd.f32 %v600, %v784
    %786 = vdwg.mxu0
    %787 = vmatpush.msra.mxu0 %v210
    %788 = vmatpush.msra.mxu0 %v206
    %789 = vmatpush.msra.mxu0 %v202
    %790 = vmatpush.msra.mxu0 %v198
    %791 = vmatpush.msra.mxu0 %v194
    %792 = vmatpush.msra.mxu0 %v190
    %793 = vmatpush.msra.mxu0 %v186
    %794 = vmatpush.msra.mxu0 %v182
    %795 = vmatpush.msra.mxu0 %v178
    %796 = vmatpush.msra.mxu0 %v174
    %797 = vmatpush.msra.mxu0 %v170
    %798 = vmatpush.msra.mxu0 %v166
    %799 = vmatpush.msra.mxu0 %v162
    %800 = vmatpush.msra.mxu0 %v158
    %801 = vmatpush.msra.mxu0 %v154
    %802 = vmatpush.msra.mxu0 %v150
    %803 = vmatmul.f32.gmra.mxu0 %v78
    %v804 = vpop.f32.mrf.mxu0
    %v805 = vadd.f32 %v785, %v804
    %806 = vdwg.mxu0
    %807 = vmatpush.msra.mxu0 %v274
    %808 = vmatpush.msra.mxu0 %v270
    %809 = vmatpush.msra.mxu0 %v266
    %810 = vmatpush.msra.mxu0 %v262
    %811 = vmatpush.msra.mxu0 %v258
    %812 = vmatpush.msra.mxu0 %v254
    %813 = vmatpush.msra.mxu0 %v250
    %814 = vmatpush.msra.mxu0 %v246
    %815 = vmatpush.msra.mxu0 %v242
    %816 = vmatpush.msra.mxu0 %v238
    %817 = vmatpush.msra.mxu0 %v234
    %818 = vmatpush.msra.mxu0 %v230
    %819 = vmatpush.msra.mxu0 %v226
    %820 = vmatpush.msra.mxu0 %v222
    %821 = vmatpush.msra.mxu0 %v218
    %822 = vmatpush.msra.mxu0 %v214
    %823 = vmatmul.f32.gmra.mxu0 %v79
    %v824 = vpop.f32.mrf.mxu0
    %v825 = vadd.f32 %v805, %v824
    %826 = vdwg.mxu0
    %827 = vmatpush.msra.mxu0 %v338
    %828 = vmatpush.msra.mxu0 %v334
    %829 = vmatpush.msra.mxu0 %v330
    %830 = vmatpush.msra.mxu0 %v326
    %831 = vmatpush.msra.mxu0 %v322
    %832 = vmatpush.msra.mxu0 %v318
    %833 = vmatpush.msra.mxu0 %v314
    %834 = vmatpush.msra.mxu0 %v310
    %835 = vmatpush.msra.mxu0 %v306
    %836 = vmatpush.msra.mxu0 %v302
    %837 = vmatpush.msra.mxu0 %v298
    %838 = vmatpush.msra.mxu0 %v294
    %839 = vmatpush.msra.mxu0 %v290
    %840 = vmatpush.msra.mxu0 %v286
    %841 = vmatpush.msra.mxu0 %v282
    %842 = vmatpush.msra.mxu0 %v278
    %843 = vmatmul.f32.gmra.mxu0 %v80
    %v844 = vpop.f32.mrf.mxu0
    %v845 = vadd.f32 %v825, %v844
    %846 = vdwg.mxu0
    %847 = vmatpush.msra.mxu0 %v402
    %848 = vmatpush.msra.mxu0 %v398
    %849 = vmatpush.msra.mxu0 %v394
    %850 = vmatpush.msra.mxu0 %v390
    %851 = vmatpush.msra.mxu0 %v386
    %852 = vmatpush.msra.mxu0 %v382
    %853 = vmatpush.msra.mxu0 %v378
    %854 = vmatpush.msra.mxu0 %v374
    %855 = vmatpush.msra.mxu0 %v370
    %856 = vmatpush.msra.mxu0 %v366
    %857 = vmatpush.msra.mxu0 %v362
    %858 = vmatpush.msra.mxu0 %v358
    %859 = vmatpush.msra.mxu0 %v354
    %860 = vmatpush.msra.mxu0 %v350
    %861 = vmatpush.msra.mxu0 %v346
    %862 = vmatpush.msra.mxu0 %v342
    %863 = vmatmul.f32.gmra.mxu0 %v81
    %v864 = vpop.f32.mrf.mxu0
    %v865 = vadd.f32 %v845, %v864
    %866 = vdwg.mxu0
    %867 = vmatpush.msra.mxu0 %v466
    %868 = vmatpush.msra.mxu0 %v462
    %869 = vmatpush.msra.mxu0 %v458
    %870 = vmatpush.msra.mxu0 %v454
    %871 = vmatpush.msra.mxu0 %v450
    %872 = vmatpush.msra.mxu0 %v446
    %873 = vmatpush.msra.mxu0 %v442
    %874 = vmatpush.msra.mxu0 %v438
    %875 = vmatpush.msra.mxu0 %v434
    %876 = vmatpush.msra.mxu0 %v430
    %877 = vmatpush.msra.mxu0 %v426
    %878 = vmatpush.msra.mxu0 %v422
    %879 = vmatpush.msra.mxu0 %v418
    %880 = vmatpush.msra.mxu0 %v414
    %881 = vmatpush.msra.mxu0 %v410
    %882 = vmatpush.msra.mxu0 %v406
    %883 = vmatmul.f32.gmra.mxu0 %v82
    %v884 = vpop.f32.mrf.mxu0
    %v885 = vadd.f32 %v865, %v884
    %886 = vdwg.mxu0
    %887 = vmatpush.msra.mxu0 %v530
    %888 = vmatpush.msra.mxu0 %v526
    %889 = vmatpush.msra.mxu0 %v522
    %890 = vmatpush.msra.mxu0 %v518
    %891 = vmatpush.msra.mxu0 %v514
    %892 = vmatpush.msra.mxu0 %v510
    %893 = vmatpush.msra.mxu0 %v506
    %894 = vmatpush.msra.mxu0 %v502
    %895 = vmatpush.msra.mxu0 %v498
    %896 = vmatpush.msra.mxu0 %v494
    %897 = vmatpush.msra.mxu0 %v490
    %898 = vmatpush.msra.mxu0 %v486
    %899 = vmatpush.msra.mxu0 %v482
    %900 = vmatpush.msra.mxu0 %v478
    %901 = vmatpush.msra.mxu0 %v474
    %902 = vmatpush.msra.mxu0 %v470
    %903 = vmatmul.f32.gmra.mxu0 %v83
    %v904 = vpop.f32.mrf.mxu0
    %v905 = vadd.f32 %v885, %v904
    %906 = vdwg.mxu0
    %907 = vmatpush.msra.mxu0 %v594
    %908 = vmatpush.msra.mxu0 %v590
    %909 = vmatpush.msra.mxu0 %v586
    %910 = vmatpush.msra.mxu0 %v582
    %911 = vmatpush.msra.mxu0 %v578
    %912 = vmatpush.msra.mxu0 %v574
    %913 = vmatpush.msra.mxu0 %v570
    %914 = vmatpush.msra.mxu0 %v566
    %915 = vmatpush.msra.mxu0 %v562
    %916 = vmatpush.msra.mxu0 %v558
    %917 = vmatpush.msra.mxu0 %v554
    %918 = vmatpush.msra.mxu0 %v550
    %919 = vmatpush.msra.mxu0 %v546
    %920 = vmatpush.msra.mxu0 %v542
    %921 = vmatpush.msra.mxu0 %v538
    %922 = vmatpush.msra.mxu0 %v534
    %923 = vmatmul.f32.gmra.mxu0 %v84
    %v924 = vpop.f32.mrf.mxu0
    %v925 = vadd.f32 %v905, %v924
    %926 = vdwg.mxu0
    %927 = vmatpush.msra.mxu0 %v147
    %928 = vmatpush.msra.mxu0 %v143
    %929 = vmatpush.msra.mxu0 %v139
    %930 = vmatpush.msra.mxu0 %v135
    %931 = vmatpush.msra.mxu0 %v131
    %932 = vmatpush.msra.mxu0 %v127
    %933 = vmatpush.msra.mxu0 %v123
    %934 = vmatpush.msra.mxu0 %v119
    %935 = vmatpush.msra.mxu0 %v115
    %936 = vmatpush.msra.mxu0 %v111
    %937 = vmatpush.msra.mxu0 %v107
    %938 = vmatpush.msra.mxu0 %v103
    %939 = vmatpush.msra.mxu0 %v99
    %940 = vmatpush.msra.mxu0 %v95
    %941 = vmatpush.msra.mxu0 %v91
    %942 = vmatpush.msra.mxu0 %v87
    %943 = vmatmul.f32.gmra.mxu0 %v77
    %v944 = vpop.f32.mrf.mxu0
    %v945 = vadd.f32 %v601, %v944
    %946 = vdwg.mxu0
    %947 = vmatpush.msra.mxu0 %v211
    %948 = vmatpush.msra.mxu0 %v207
    %949 = vmatpush.msra.mxu0 %v203
    %950 = vmatpush.msra.mxu0 %v199
    %951 = vmatpush.msra.mxu0 %v195
    %952 = vmatpush.msra.mxu0 %v191
    %953 = vmatpush.msra.mxu0 %v187
    %954 = vmatpush.msra.mxu0 %v183
    %955 = vmatpush.msra.mxu0 %v179
    %956 = vmatpush.msra.mxu0 %v175
    %957 = vmatpush.msra.mxu0 %v171
    %958 = vmatpush.msra.mxu0 %v167
    %959 = vmatpush.msra.mxu0 %v163
    %960 = vmatpush.msra.mxu0 %v159
    %961 = vmatpush.msra.mxu0 %v155
    %962 = vmatpush.msra.mxu0 %v151
    %963 = vmatmul.f32.gmra.mxu0 %v78
    %v964 = vpop.f32.mrf.mxu0
    %v965 = vadd.f32 %v945, %v964
    %966 = vdwg.mxu0
    %967 = vmatpush.msra.mxu0 %v275
    %968 = vmatpush.msra.mxu0 %v271
    %969 = vmatpush.msra.mxu0 %v267
    %970 = vmatpush.msra.mxu0 %v263
    %971 = vmatpush.msra.mxu0 %v259
    %972 = vmatpush.msra.mxu0 %v255
    %973 = vmatpush.msra.mxu0 %v251
    %974 = vmatpush.msra.mxu0 %v247
    %975 = vmatpush.msra.mxu0 %v243
    %976 = vmatpush.msra.mxu0 %v239
    %977 = vmatpush.msra.mxu0 %v235
    %978 = vmatpush.msra.mxu0 %v231
    %979 = vmatpush.msra.mxu0 %v227
    %980 = vmatpush.msra.mxu0 %v223
    %981 = vmatpush.msra.mxu0 %v219
    %982 = vmatpush.msra.mxu0 %v215
    %983 = vmatmul.f32.gmra.mxu0 %v79
    %v984 = vpop.f32.mrf.mxu0
    %v985 = vadd.f32 %v965, %v984
    %986 = vdwg.mxu0
    %987 = vmatpush.msra.mxu0 %v339
    %988 = vmatpush.msra.mxu0 %v335
    %989 = vmatpush.msra.mxu0 %v331
    %990 = vmatpush.msra.mxu0 %v327
    %991 = vmatpush.msra.mxu0 %v323
    %992 = vmatpush.msra.mxu0 %v319
    %993 = vmatpush.msra.mxu0 %v315
    %994 = vmatpush.msra.mxu0 %v311
    %995 = vmatpush.msra.mxu0 %v307
    %996 = vmatpush.msra.mxu0 %v303
    %997 = vmatpush.msra.mxu0 %v299
    %998 = vmatpush.msra.mxu0 %v295
    %999 = vmatpush.msra.mxu0 %v291
    %1000 = vmatpush.msra.mxu0 %v287
    %1001 = vmatpush.msra.mxu0 %v283
    %1002 = vmatpush.msra.mxu0 %v279
    %1003 = vmatmul.f32.gmra.mxu0 %v80
    %v1004 = vpop.f32.mrf.mxu0
    %v1005 = vadd.f32 %v985, %v1004
    %1006 = vdwg.mxu0
    %1007 = vmatpush.msra.mxu0 %v403
    %1008 = vmatpush.msra.mxu0 %v399
    %1009 = vmatpush.msra.mxu0 %v395
    %1010 = vmatpush.msra.mxu0 %v391
    %1011 = vmatpush.msra.mxu0 %v387
    %1012 = vmatpush.msra.mxu0 %v383
    %1013 = vmatpush.msra.mxu0 %v379
    %1014 = vmatpush.msra.mxu0 %v375
    %1015 = vmatpush.msra.mxu0 %v371
    %1016 = vmatpush.msra.mxu0 %v367
    %1017 = vmatpush.msra.mxu0 %v363
    %1018 = vmatpush.msra.mxu0 %v359
    %1019 = vmatpush.msra.mxu0 %v355
    %1020 = vmatpush.msra.mxu0 %v351
    %1021 = vmatpush.msra.mxu0 %v347
    %1022 = vmatpush.msra.mxu0 %v343
    %1023 = vmatmul.f32.gmra.mxu0 %v81
    %v1024 = vpop.f32.mrf.mxu0
    %v1025 = vadd.f32 %v1005, %v1024
    %1026 = vdwg.mxu0
    %1027 = vmatpush.msra.mxu0 %v467
    %1028 = vmatpush.msra.mxu0 %v463
    %1029 = vmatpush.msra.mxu0 %v459
    %1030 = vmatpush.msra.mxu0 %v455
    %1031 = vmatpush.msra.mxu0 %v451
    %1032 = vmatpush.msra.mxu0 %v447
    %1033 = vmatpush.msra.mxu0 %v443
    %1034 = vmatpush.msra.mxu0 %v439
    %1035 = vmatpush.msra.mxu0 %v435
    %1036 = vmatpush.msra.mxu0 %v431
    %1037 = vmatpush.msra.mxu0 %v427
    %1038 = vmatpush.msra.mxu0 %v423
    %1039 = vmatpush.msra.mxu0 %v419
    %1040 = vmatpush.msra.mxu0 %v415
    %1041 = vmatpush.msra.mxu0 %v411
    %1042 = vmatpush.msra.mxu0 %v407
    %1043 = vmatmul.f32.gmra.mxu0 %v82
    %v1044 = vpop.f32.mrf.mxu0
    %v1045 = vadd.f32 %v1025, %v1044
    %1046 = vdwg.mxu0
    %1047 = vmatpush.msra.mxu0 %v531
    %1048 = vmatpush.msra.mxu0 %v527
    %1049 = vmatpush.msra.mxu0 %v523
    %1050 = vmatpush.msra.mxu0 %v519
    %1051 = vmatpush.msra.mxu0 %v515
    %1052 = vmatpush.msra.mxu0 %v511
    %1053 = vmatpush.msra.mxu0 %v507
    %1054 = vmatpush.msra.mxu0 %v503
    %1055 = vmatpush.msra.mxu0 %v499
    %1056 = vmatpush.msra.mxu0 %v495
    %1057 = vmatpush.msra.mxu0 %v491
    %1058 = vmatpush.msra.mxu0 %v487
    %1059 = vmatpush.msra.mxu0 %v483
    %1060 = vmatpush.msra.mxu0 %v479
    %1061 = vmatpush.msra.mxu0 %v475
    %1062 = vmatpush.msra.mxu0 %v471
    %1063 = vmatmul.f32.gmra.mxu0 %v83
    %v1064 = vpop.f32.mrf.mxu0
    %v1065 = vadd.f32 %v1045, %v1064
    %1066 = vdwg.mxu0
    %1067 = vmatpush.msra.mxu0 %v595
    %1068 = vmatpush.msra.mxu0 %v591
    %1069 = vmatpush.msra.mxu0 %v587
    %1070 = vmatpush.msra.mxu0 %v583
    %1071 = vmatpush.msra.mxu0 %v579
    %1072 = vmatpush.msra.mxu0 %v575
    %1073 = vmatpush.msra.mxu0 %v571
    %1074 = vmatpush.msra.mxu0 %v567
    %1075 = vmatpush.msra.mxu0 %v563
    %1076 = vmatpush.msra.mxu0 %v559
    %1077 = vmatpush.msra.mxu0 %v555
    %1078 = vmatpush.msra.mxu0 %v551
    %1079 = vmatpush.msra.mxu0 %v547
    %1080 = vmatpush.msra.mxu0 %v543
    %1081 = vmatpush.msra.mxu0 %v539
    %1082 = vmatpush.msra.mxu0 %v535
    %1083 = vmatmul.f32.gmra.mxu0 %v84
    %v1084 = vpop.f32.mrf.mxu0
    %v1085 = vadd.f32 %v1065, %v1084
    %1086 = vdwg.mxu0
    %1087 = vmatpush.msra.mxu0 %v148
    %1088 = vmatpush.msra.mxu0 %v144
    %1089 = vmatpush.msra.mxu0 %v140
    %1090 = vmatpush.msra.mxu0 %v136
    %1091 = vmatpush.msra.mxu0 %v132
    %1092 = vmatpush.msra.mxu0 %v128
    %1093 = vmatpush.msra.mxu0 %v124
    %1094 = vmatpush.msra.mxu0 %v120
    %1095 = vmatpush.msra.mxu0 %v116
    %1096 = vmatpush.msra.mxu0 %v112
    %1097 = vmatpush.msra.mxu0 %v108
    %1098 = vmatpush.msra.mxu0 %v104
    %1099 = vmatpush.msra.mxu0 %v100
    %1100 = vmatpush.msra.mxu0 %v96
    %1101 = vmatpush.msra.mxu0 %v92
    %1102 = vmatpush.msra.mxu0 %v88
    %1103 = vmatmul.f32.gmra.mxu0 %v77
    %v1104 = vpop.f32.mrf.mxu0
    %v1105 = vadd.f32 %v602, %v1104
    %1106 = vdwg.mxu0
    %1107 = vmatpush.msra.mxu0 %v212
    %1108 = vmatpush.msra.mxu0 %v208
    %1109 = vmatpush.msra.mxu0 %v204
    %1110 = vmatpush.msra.mxu0 %v200
    %1111 = vmatpush.msra.mxu0 %v196
    %1112 = vmatpush.msra.mxu0 %v192
    %1113 = vmatpush.msra.mxu0 %v188
    %1114 = vmatpush.msra.mxu0 %v184
    %1115 = vmatpush.msra.mxu0 %v180
    %1116 = vmatpush.msra.mxu0 %v176
    %1117 = vmatpush.msra.mxu0 %v172
    %1118 = vmatpush.msra.mxu0 %v168
    %1119 = vmatpush.msra.mxu0 %v164
    %1120 = vmatpush.msra.mxu0 %v160
    %1121 = vmatpush.msra.mxu0 %v156
    %1122 = vmatpush.msra.mxu0 %v152
    %1123 = vmatmul.f32.gmra.mxu0 %v78
    %v1124 = vpop.f32.mrf.mxu0
    %v1125 = vadd.f32 %v1105, %v1124
    %1126 = vdwg.mxu0
    %1127 = vmatpush.msra.mxu0 %v276
    %1128 = vmatpush.msra.mxu0 %v272
    %1129 = vmatpush.msra.mxu0 %v268
    %1130 = vmatpush.msra.mxu0 %v264
    %1131 = vmatpush.msra.mxu0 %v260
    %1132 = vmatpush.msra.mxu0 %v256
    %1133 = vmatpush.msra.mxu0 %v252
    %1134 = vmatpush.msra.mxu0 %v248
    %1135 = vmatpush.msra.mxu0 %v244
    %1136 = vmatpush.msra.mxu0 %v240
    %1137 = vmatpush.msra.mxu0 %v236
    %1138 = vmatpush.msra.mxu0 %v232
    %1139 = vmatpush.msra.mxu0 %v228
    %1140 = vmatpush.msra.mxu0 %v224
    %1141 = vmatpush.msra.mxu0 %v220
    %1142 = vmatpush.msra.mxu0 %v216
    %1143 = vmatmul.f32.gmra.mxu0 %v79
    %v1144 = vpop.f32.mrf.mxu0
    %v1145 = vadd.f32 %v1125, %v1144
    %1146 = vdwg.mxu0
    %1147 = vmatpush.msra.mxu0 %v340
    %1148 = vmatpush.msra.mxu0 %v336
    %1149 = vmatpush.msra.mxu0 %v332
    %1150 = vmatpush.msra.mxu0 %v328
    %1151 = vmatpush.msra.mxu0 %v324
    %1152 = vmatpush.msra.mxu0 %v320
    %1153 = vmatpush.msra.mxu0 %v316
    %1154 = vmatpush.msra.mxu0 %v312
    %1155 = vmatpush.msra.mxu0 %v308
    %1156 = vmatpush.msra.mxu0 %v304
    %1157 = vmatpush.msra.mxu0 %v300
    %1158 = vmatpush.msra.mxu0 %v296
    %1159 = vmatpush.msra.mxu0 %v292
    %1160 = vmatpush.msra.mxu0 %v288
    %1161 = vmatpush.msra.mxu0 %v284
    %1162 = vmatpush.msra.mxu0 %v280
    %1163 = vmatmul.f32.gmra.mxu0 %v80
    %v1164 = vpop.f32.mrf.mxu0
    %v1165 = vadd.f32 %v1145, %v1164
    %1166 = vdwg.mxu0
    %1167 = vmatpush.msra.mxu0 %v404
    %1168 = vmatpush.msra.mxu0 %v400
    %1169 = vmatpush.msra.mxu0 %v396
    %1170 = vmatpush.msra.mxu0 %v392
    %1171 = vmatpush.msra.mxu0 %v388
    %1172 = vmatpush.msra.mxu0 %v384
    %1173 = vmatpush.msra.mxu0 %v380
    %1174 = vmatpush.msra.mxu0 %v376
    %1175 = vmatpush.msra.mxu0 %v372
    %1176 = vmatpush.msra.mxu0 %v368
    %1177 = vmatpush.msra.mxu0 %v364
    %1178 = vmatpush.msra.mxu0 %v360
    %1179 = vmatpush.msra.mxu0 %v356
    %1180 = vmatpush.msra.mxu0 %v352
    %1181 = vmatpush.msra.mxu0 %v348
    %1182 = vmatpush.msra.mxu0 %v344
    %1183 = vmatmul.f32.gmra.mxu0 %v81
    %v1184 = vpop.f32.mrf.mxu0
    %v1185 = vadd.f32 %v1165, %v1184
    %1186 = vdwg.mxu0
    %1187 = vmatpush.msra.mxu0 %v468
    %1188 = vmatpush.msra.mxu0 %v464
    %1189 = vmatpush.msra.mxu0 %v460
    %1190 = vmatpush.msra.mxu0 %v456
    %1191 = vmatpush.msra.mxu0 %v452
    %1192 = vmatpush.msra.mxu0 %v448
    %1193 = vmatpush.msra.mxu0 %v444
    %1194 = vmatpush.msra.mxu0 %v440
    %1195 = vmatpush.msra.mxu0 %v436
    %1196 = vmatpush.msra.mxu0 %v432
    %1197 = vmatpush.msra.mxu0 %v428
    %1198 = vmatpush.msra.mxu0 %v424
    %1199 = vmatpush.msra.mxu0 %v420
    %1200 = vmatpush.msra.mxu0 %v416
    %1201 = vmatpush.msra.mxu0 %v412
    %1202 = vmatpush.msra.mxu0 %v408
    %1203 = vmatmul.f32.gmra.mxu0 %v82
    %v1204 = vpop.f32.mrf.mxu0
    %v1205 = vadd.f32 %v1185, %v1204
    %1206 = vdwg.mxu0
    %1207 = vmatpush.msra.mxu0 %v532
    %1208 = vmatpush.msra.mxu0 %v528
    %1209 = vmatpush.msra.mxu0 %v524
    %1210 = vmatpush.msra.mxu0 %v520
    %1211 = vmatpush.msra.mxu0 %v516
    %1212 = vmatpush.msra.mxu0 %v512
    %1213 = vmatpush.msra.mxu0 %v508
    %1214 = vmatpush.msra.mxu0 %v504
    %1215 = vmatpush.msra.mxu0 %v500
    %1216 = vmatpush.msra.mxu0 %v496
    %1217 = vmatpush.msra.mxu0 %v492
    %1218 = vmatpush.msra.mxu0 %v488
    %1219 = vmatpush.msra.mxu0 %v484
    %1220 = vmatpush.msra.mxu0 %v480
    %1221 = vmatpush.msra.mxu0 %v476
    %1222 = vmatpush.msra.mxu0 %v472
    %1223 = vmatmul.f32.gmra.mxu0 %v83
    %v1224 = vpop.f32.mrf.mxu0
    %v1225 = vadd.f32 %v1205, %v1224
    %1226 = vdwg.mxu0
    %1227 = vmatpush.msra.mxu0 %v596
    %1228 = vmatpush.msra.mxu0 %v592
    %1229 = vmatpush.msra.mxu0 %v588
    %1230 = vmatpush.msra.mxu0 %v584
    %1231 = vmatpush.msra.mxu0 %v580
    %1232 = vmatpush.msra.mxu0 %v576
    %1233 = vmatpush.msra.mxu0 %v572
    %1234 = vmatpush.msra.mxu0 %v568
    %1235 = vmatpush.msra.mxu0 %v564
    %1236 = vmatpush.msra.mxu0 %v560
    %1237 = vmatpush.msra.mxu0 %v556
    %1238 = vmatpush.msra.mxu0 %v552
    %1239 = vmatpush.msra.mxu0 %v548
    %1240 = vmatpush.msra.mxu0 %v544
    %1241 = vmatpush.msra.mxu0 %v540
    %1242 = vmatpush.msra.mxu0 %v536
    %1243 = vmatmul.f32.gmra.mxu0 %v84
    %v1244 = vpop.f32.mrf.mxu0
    %v1245 = vadd.f32 %v1225, %v1244
    %1246 = vdwg.mxu0
    %v1247 = vmul.f32 %v765, %v765
    %v1248 = vmul.f32 %v925, %v925
    %v1249 = vmul.f32 %v1085, %v1085
    %v1250 = vmul.f32 %v1245, %v1245
    %v1251 = vadd.f32 %v1247, %v1248
    %v1252 = vadd.f32 %v1251, %v1249
    %v1253 = vadd.f32 %v1252, %v1250
    %1254 = vadd.xlane.f32.xlu0 %v1253
    %v1255 = vpop.xlane.xlu0 %1254
    %v1256 = vrsqrt.pop %v1255
    %v1257 = vmul.f32 %v1256, %v1255
    %v1258 = vmul.f32 %v1257, %v1256
    %v1259 = vmul.f32 0.5, %v1258
    %v1260 = vsub.f32 1.5, %v1259
    %v1261 = vmul.f32 %v1256, %v1260
    %vm1262 = vweird.f32 %v1255
    %vm1263 = vweird.f32 %v1256
    %vm1264 = vmor %vm1262, %vm1263
    %v1265 = vsel %vm1264, %v1256, %v1261
    %v1266 = vld [vmem:[#allocation8] sm:$0xff]
    %v1267 = vld [vmem:[#allocation8 + $0x8] sm:$0xff]
    %v1268 = vld [vmem:[#allocation8 + $0x10] sm:$0xff]
    %v1269 = vld [vmem:[#allocation8 + $0x18] sm:$0xff]
    %v1270 = vld [vmem:[#allocation8 + $0x20] sm:$0xff]
    %v1271 = vld [vmem:[#allocation8 + $0x28] sm:$0xff]
    %v1272 = vld [vmem:[#allocation8 + $0x30] sm:$0xff]
    %v1273 = vld [vmem:[#allocation8 + $0x38] sm:$0xff]
    %v1274 = vld [vmem:[#allocation8 + $0x40] sm:$0xff]
    %v1275 = vld [vmem:[#allocation8 + $0x48] sm:$0xff]
    %v1276 = vld [vmem:[#allocation8 + $0x50] sm:$0xff]
    %v1277 = vld [vmem:[#allocation8 + $0x58] sm:$0xff]
    %v1278 = vld [vmem:[#allocation8 + $0x60] sm:$0xff]
    %v1279 = vld [vmem:[#allocation8 + $0x68] sm:$0xff]
    %v1280 = vld [vmem:[#allocation8 + $0x70] sm:$0xff]
    %v1281 = vld [vmem:[#allocation8 + $0x78] sm:$0xff]
    %v1282 = vld [vmem:[#allocation8 + $0x80] sm:$0xff]
    %v1283 = vld [vmem:[#allocation8 + $0x88] sm:$0xff]
    %v1284 = vld [vmem:[#allocation8 + $0x90] sm:$0xff]
    %v1285 = vld [vmem:[#allocation8 + $0x98] sm:$0xff]
    %v1286 = vld [vmem:[#allocation8 + $0xa0] sm:$0xff]
    %v1287 = vld [vmem:[#allocation8 + $0xa8] sm:$0xff]
    %v1288 = vld [vmem:[#allocation8 + $0xb0] sm:$0xff]
    %v1289 = vld [vmem:[#allocation8 + $0xb8] sm:$0xff]
    %v1290 = vld [vmem:[#allocation8 + $0xc0] sm:$0xff]
    %v1291 = vld [vmem:[#allocation8 + $0xc8] sm:$0xff]
    %v1292 = vld [vmem:[#allocation8 + $0xd0] sm:$0xff]
    %v1293 = vld [vmem:[#allocation8 + $0xd8] sm:$0xff]
    %v1294 = vld [vmem:[#allocation8 + $0xe0] sm:$0xff]
    %v1295 = vld [vmem:[#allocation8 + $0xe8] sm:$0xff]
    %v1296 = vld [vmem:[#allocation8 + $0xf0] sm:$0xff]
    %v1297 = vld [vmem:[#allocation8 + $0xf8] sm:$0xff]
    %v1298 = vld [vmem:[#allocation8 + $0x100] sm:$0xff]
    %v1299 = vld [vmem:[#allocation8 + $0x108] sm:$0xff]
    %v1300 = vld [vmem:[#allocation8 + $0x110] sm:$0xff]
    %v1301 = vld [vmem:[#allocation8 + $0x118] sm:$0xff]
    %v1302 = vld [vmem:[#allocation8 + $0x120] sm:$0xff]
    %v1303 = vld [vmem:[#allocation8 + $0x128] sm:$0xff]
    %v1304 = vld [vmem:[#allocation8 + $0x130] sm:$0xff]
    %v1305 = vld [vmem:[#allocation8 + $0x138] sm:$0xff]
    %v1306 = vld [vmem:[#allocation8 + $0x140] sm:$0xff]
    %v1307 = vld [vmem:[#allocation8 + $0x148] sm:$0xff]
    %v1308 = vld [vmem:[#allocation8 + $0x150] sm:$0xff]
    %v1309 = vld [vmem:[#allocation8 + $0x158] sm:$0xff]
    %v1310 = vld [vmem:[#allocation8 + $0x160] sm:$0xff]
    %v1311 = vld [vmem:[#allocation8 + $0x168] sm:$0xff]
    %v1312 = vld [vmem:[#allocation8 + $0x170] sm:$0xff]
    %v1313 = vld [vmem:[#allocation8 + $0x178] sm:$0xff]
    %v1314 = vld [vmem:[#allocation8 + $0x180] sm:$0xff]
    %v1315 = vld [vmem:[#allocation8 + $0x188] sm:$0xff]
    %v1316 = vld [vmem:[#allocation8 + $0x190] sm:$0xff]
    %v1317 = vld [vmem:[#allocation8 + $0x198] sm:$0xff]
    %v1318 = vld [vmem:[#allocation8 + $0x1a0] sm:$0xff]
    %v1319 = vld [vmem:[#allocation8 + $0x1a8] sm:$0xff]
    %v1320 = vld [vmem:[#allocation8 + $0x1b0] sm:$0xff]
    %v1321 = vld [vmem:[#allocation8 + $0x1b8] sm:$0xff]
    %v1322 = vld [vmem:[#allocation8 + $0x1c0] sm:$0xff]
    %v1323 = vld [vmem:[#allocation8 + $0x1c8] sm:$0xff]
    %v1324 = vld [vmem:[#allocation8 + $0x1d0] sm:$0xff]
    %v1325 = vld [vmem:[#allocation8 + $0x1d8] sm:$0xff]
    %v1326 = vld [vmem:[#allocation8 + $0x1e0] sm:$0xff]
    %v1327 = vld [vmem:[#allocation8 + $0x1e8] sm:$0xff]
    %v1328 = vld [vmem:[#allocation8 + $0x1f0] sm:$0xff]
    %v1329 = vld [vmem:[#allocation8 + $0x1f8] sm:$0xff]
    %1330 = vmatpush.msra.mxu0 %v1281
    %1331 = vmatpush.msra.mxu0 %v1280
    %1332 = vmatpush.msra.mxu0 %v1279
    %1333 = vmatpush.msra.mxu0 %v1278
    %1334 = vmatpush.msra.mxu0 %v1277
    %1335 = vmatpush.msra.mxu0 %v1276
    %1336 = vmatpush.msra.mxu0 %v1275
    %1337 = vmatpush.msra.mxu0 %v1274
    %1338 = vmatpush.msra.mxu0 %v1273
    %1339 = vmatpush.msra.mxu0 %v1272
    %1340 = vmatpush.msra.mxu0 %v1271
    %1341 = vmatpush.msra.mxu0 %v1270
    %1342 = vmatpush.msra.mxu0 %v1269
    %1343 = vmatpush.msra.mxu0 %v1268
    %1344 = vmatpush.msra.mxu0 %v1267
    %1345 = vmatpush.msra.mxu0 %v1266
    %1346 = vmatmul.f32.gmra.mxu0 %v765
    %v1347 = vpop.f32.mrf.mxu0
    %v1348 = vadd.f32 0.0, %v1347
    %1349 = vdwg.mxu0
    %1350 = vmatpush.msra.mxu0 %v1297
    %1351 = vmatpush.msra.mxu0 %v1296
    %1352 = vmatpush.msra.mxu0 %v1295
    %1353 = vmatpush.msra.mxu0 %v1294
    %1354 = vmatpush.msra.mxu0 %v1293
    %1355 = vmatpush.msra.mxu0 %v1292
    %1356 = vmatpush.msra.mxu0 %v1291
    %1357 = vmatpush.msra.mxu0 %v1290
    %1358 = vmatpush.msra.mxu0 %v1289
    %1359 = vmatpush.msra.mxu0 %v1288
    %1360 = vmatpush.msra.mxu0 %v1287
    %1361 = vmatpush.msra.mxu0 %v1286
    %1362 = vmatpush.msra.mxu0 %v1285
    %1363 = vmatpush.msra.mxu0 %v1284
    %1364 = vmatpush.msra.mxu0 %v1283
    %1365 = vmatpush.msra.mxu0 %v1282
    %1366 = vmatmul.f32.gmra.mxu0 %v925
    %v1367 = vpop.f32.mrf.mxu0
    %v1368 = vadd.f32 %v1348, %v1367
    %1369 = vdwg.mxu0
    %1370 = vmatpush.msra.mxu0 %v1313
    %1371 = vmatpush.msra.mxu0 %v1312
    %1372 = vmatpush.msra.mxu0 %v1311
    %1373 = vmatpush.msra.mxu0 %v1310
    %1374 = vmatpush.msra.mxu0 %v1309
    %1375 = vmatpush.msra.mxu0 %v1308
    %1376 = vmatpush.msra.mxu0 %v1307
    %1377 = vmatpush.msra.mxu0 %v1306
    %1378 = vmatpush.msra.mxu0 %v1305
    %1379 = vmatpush.msra.mxu0 %v1304
    %1380 = vmatpush.msra.mxu0 %v1303
    %1381 = vmatpush.msra.mxu0 %v1302
    %1382 = vmatpush.msra.mxu0 %v1301
    %1383 = vmatpush.msra.mxu0 %v1300
    %1384 = vmatpush.msra.mxu0 %v1299
    %1385 = vmatpush.msra.mxu0 %v1298
    %1386 = vmatmul.f32.gmra.mxu0 %v1085
    %v1387 = vpop.f32.mrf.mxu0
    %v1388 = vadd.f32 %v1368, %v1387
    %1389 = vdwg.mxu0
    %1390 = vmatpush.msra.mxu0 %v1329
    %1391 = vmatpush.msra.mxu0 %v1328
    %1392 = vmatpush.msra.mxu0 %v1327
    %1393 = vmatpush.msra.mxu0 %v1326
    %1394 = vmatpush.msra.mxu0 %v1325
    %1395 = vmatpush.msra.mxu0 %v1324
    %1396 = vmatpush.msra.mxu0 %v1323
    %1397 = vmatpush.msra.mxu0 %v1322
    %1398 = vmatpush.msra.mxu0 %v1321
    %1399 = vmatpush.msra.mxu0 %v1320
    %1400 = vmatpush.msra.mxu0 %v1319
    %1401 = vmatpush.msra.mxu0 %v1318
    %1402 = vmatpush.msra.mxu0 %v1317
    %1403 = vmatpush.msra.mxu0 %v1316
    %1404 = vmatpush.msra.mxu0 %v1315
    %1405 = vmatpush.msra.mxu0 %v1314
    %1406 = vmatmul.f32.gmra.mxu0 %v1245
    %v1407 = vpop.f32.mrf.mxu0
    %v1408 = vadd.f32 %v1388, %v1407
    %1409 = vdwg.mxu0
    %v1410 = vmul.f32 %v1408, %v1265
    %1411 = vst [vmem:[#allocation10] sm:$0xff] %v1410
    // Predicated region
    $region34: #{tpu_custom_call.1} parent=1 // pred_check
      _
    $region35: #{tpu_custom_call.1} parent=1 // pred_check_branch
      %1413 = sbr.rel (0) target = $region37
    $region36: #{tpu_custom_call.1} parent=1 // pred_region
      %1415 = vsyncadd [#allocation4], 0
      %s1417 = sshll.u32 [#allocation10], 4
      %s1418 = int_to_ptr.vmem [resolvable:$true] %s1417
      %s1419 = sshll.u32 %s4, 4
      %s1420 = int_to_ptr.hbm [resolvable:$true] %s1419
      %1422 = dma.vmem_to_hbm [thread:$0]  %s1418, 128, %s1420, [#allocation4]
    $region37: #{tpu_custom_call.1} parent=1 // pred_fallthru
      _
    // Predicated region
    $region38: #{tpu_custom_call.1} parent=1 // pred_check
      _
    $region39: #{tpu_custom_call.1} parent=1 // pred_check_branch
      %1424 = sbr.rel (0) target = $region41
    $region40: #{tpu_custom_call.1} parent=1 // pred_region
      %1426 = dma.done [#allocation4], 128
    $region41: #{tpu_custom_call.1} parent=1 // pred_fallthru
      _
    %1427 = vsyncpa [#allocation3], 1
    %1428 = vsyncpa [#allocation6], 1
    %1429 = vsyncpa [#allocation9], 1
    %1430 = vsyncpa [#allocation4], 1

</llo_original>
